<compile_context>
chip_gen: v7x
topology: tpu7x:2x2x1
jax: 0.10.0
libtpu: 0.0.40
codegen_flags: <defaults>
</compile_context>

<pallas_src>
import functools
import math

import jax
import jax.numpy as jnp
from jax.experimental import pallas as pl
from jax.experimental.pallas import tpu as pltpu


# ----------------------------------------------------------------------------
# Positional encoder (mirrors PosEncoder: [identity, sin(f0 x), cos(f0 x), ...])
# ----------------------------------------------------------------------------
def pos_encode(x, num_frequencies, include_identity=True):
    outs = []
    if include_identity:
        outs.append(x)
    if num_frequencies > 0:
        freqs = 2.0 ** jnp.linspace(0.0, num_frequencies - 1, num_frequencies)
        for f in freqs:  # static python loop (tiny)
            outs.append(jnp.sin(x * f))
            outs.append(jnp.cos(x * f))
    return jnp.concatenate(outs, axis=-1)


# ----------------------------------------------------------------------------
# Pallas kernel: full MLP for one tile of points
# ----------------------------------------------------------------------------
def weight_pred_mlp_kernel(x_ref, w0_ref, b0_ref, wh_ref, bh_ref, wl_ref, bl_ref,
                           o_ref, *, num_hidden, negative_slope):
    def leaky(v):  # LeakyReLU(0.1) in f32
        return jnp.where(v >= 0, v, negative_slope * v)

    x = x_ref[...]                                                    # (TM, Din_p)
    h = jnp.dot(x, w0_ref[...], preferred_element_type=jnp.float32) + b0_ref[...]
    h = leaky(h)
    res = h
    for i in range(num_hidden):                                       # static, unrolled
        w = wh_ref[i]                                                 # (H, H)
        h = jnp.dot(h.astype(w.dtype), w,
                    preferred_element_type=jnp.float32) + bh_ref[i] + res
        h = leaky(h)
        res = h
    wl = wl_ref[...]                                                  # (H, 24)
    logits = jnp.dot(h.astype(wl.dtype), wl,
                     preferred_element_type=jnp.float32) + bl_ref[...]
    m = jnp.max(logits, axis=-1, keepdims=True)
    e = jnp.exp(logits - m)
    o_ref[...] = (e / jnp.sum(e, axis=-1, keepdims=True)).astype(o_ref.dtype)


# ----------------------------------------------------------------------------
# Wrapper: feature build (JAX) + one fused pallas_call over point tiles
# ----------------------------------------------------------------------------
def _round_up(n, m):
    return ((n + m - 1) // m) * m


def weight_pred_forward(x, jts, params, cfg, beta=None, *, tile_m=128, use_bf16=False):
    if cfg['pose_enc']:
        x = pos_encode(x, cfg['x_freq'], True)
        jts = pos_encode(jts, cfg['jts_freq'], True)
    feats = [x, jts]
    if cfg['shape'] and beta is not None:
        feats.append(beta)
    f = jnp.concatenate(feats, axis=-1)                 # (B, N, Din)
    B, N, Din = f.shape
    M = B * N
    f = f.reshape(M, Din)

    layers = params['layers']
    W0, b0 = layers[0]
    hidden = layers[1:-1]
    Wl, bl = layers[-1]
    H = W0.shape[0]
    Cout = Wl.shape[0]
    num_hidden = len(hidden)

    mat_dtype = jnp.bfloat16 if use_bf16 else jnp.float32

    # Pad the feature dim to a multiple of 128 (lane-dense loads); zeros contribute 0.
    Din_p = _round_up(Din, 128)
    if Din_p != Din:
        f = jnp.pad(f, ((0, 0), (0, Din_p - Din)))
        W0 = jnp.pad(W0, ((0, 0), (0, Din_p - Din)))

    # Pre-transpose weights (no in-kernel transposes); biases kept f32.
    w0_t = W0.T.astype(mat_dtype)                       # (Din_p, H)
    b0_r = b0.reshape(1, H).astype(jnp.float32)
    if num_hidden:
        wh = jnp.stack([w.T for (w, _) in hidden]).astype(mat_dtype)          # (nh, H, H)
        bh = jnp.stack([b.reshape(1, H) for (_, b) in hidden]).astype(jnp.float32)
    else:
        wh = jnp.zeros((1, H, H), mat_dtype)
        bh = jnp.zeros((1, 1, H), jnp.float32)
    wl_t = Wl.T.astype(mat_dtype)                       # (H, Cout)
    bl_r = bl.reshape(1, Cout).astype(jnp.float32)

    f = f.astype(mat_dtype)

    # Pad rows to a multiple of the tile size; padded rows sliced off afterwards.
    Mp = _round_up(M, tile_m)
    if Mp != M:
        f = jnp.pad(f, ((0, Mp - M), (0, 0)))
    grid = (Mp // tile_m,)

    kern = functools.partial(weight_pred_mlp_kernel,
                             num_hidden=num_hidden, negative_slope=0.1)
    out = pl.pallas_call(
        kern,
        out_shape=jax.ShapeDtypeStruct((Mp, Cout), jnp.float32),
        grid=grid,
        in_specs=[
            pl.BlockSpec((tile_m, Din_p), lambda i: (i, 0)),
            pl.BlockSpec(w0_t.shape, lambda i: (0, 0)),
            pl.BlockSpec(b0_r.shape, lambda i: (0, 0)),
            pl.BlockSpec(wh.shape, lambda i: (0, 0, 0)),
            pl.BlockSpec(bh.shape, lambda i: (0, 0, 0)),
            pl.BlockSpec(wl_t.shape, lambda i: (0, 0)),
            pl.BlockSpec(bl_r.shape, lambda i: (0, 0)),
        ],
        out_specs=pl.BlockSpec((tile_m, Cout), lambda i: (i, 0)),
        compiler_params=pltpu.CompilerParams(dimension_semantics=("parallel",)),
    )(f, w0_t, b0_r, wh, bh, wl_t, bl_r)

    return out[:M].reshape(B, N, Cout)


# ----------------------------------------------------------------------------
# Pure-JAX reference (mirrors the PyTorch forward) for a sanity check
# ----------------------------------------------------------------------------
_HI = jax.lax.Precision.HIGHEST


def _leaky_ref(v):
    return jnp.where(v >= 0, v, 0.1 * v)


def weight_pred_reference(x, jts, params, cfg, beta=None):
    if cfg['pose_enc']:
        x = pos_encode(x, cfg['x_freq'], True)
        jts = pos_encode(jts, cfg['jts_freq'], True)
    feats = [x, jts]
    if cfg['shape'] and beta is not None:
        feats.append(beta)
    h = jnp.concatenate(feats, axis=-1)                 # (B, N, Din)

    layers = params['layers']
    W0, b0 = layers[0]
    h = _leaky_ref(jnp.einsum('bni,oi->bno', h, W0, precision=_HI) + b0)
    res = h
    for (W, b) in layers[1:-1]:
        h = _leaky_ref(jnp.einsum('bni,oi->bno', h, W, precision=_HI) + b + res)
        res = h
    Wl, bl = layers[-1]
    logits = jnp.einsum('bni,oi->bno', h, Wl, precision=_HI) + bl
    return jax.nn.softmax(logits, axis=-1)


# ----------------------------------------------------------------------------
# Deterministic parameter construction (nn.Linear-style init, synthetic)
# ----------------------------------------------------------------------------
def _linear_init(key, in_dim, out_dim):
    k1, k2 = jax.random.split(key)
    s = 1.0 / math.sqrt(in_dim)
    W = jax.random.uniform(k1, (out_dim, in_dim), jnp.float32, -s, s)
    b = jax.random.uniform(k2, (out_dim,), jnp.float32, -s, s)
    return W, b


def make_params(key, cfg):
    num_parts = cfg['num_parts']
    if cfg['pose_enc']:
        input_dim = (3 + num_parts + 3 * 2 * cfg['x_freq']
                     + num_parts * 2 * cfg['jts_freq'])
    else:
        input_dim = 3 + num_parts
        if cfg['shape']:
            input_dim += 10
    dims = []
    cur = input_dim
    for _ in range(cfg['num_layers'] - 1):
        dims.append((cur, cfg['total_dim']))
        cur = cfg['total_dim']
    dims.append((cur, cfg['num_parts']))                # final Linear(current_dim, 24)
    keys = jax.random.split(key, len(dims))
    layers = [_linear_init(k, i, o) for k, (i, o) in zip(keys, dims)]
    return {'layers': layers}


# ----------------------------------------------------------------------------
if __name__ == "__main__":
    B, N = 2, 256
    cfg = dict(pose_enc=True, body_enc=True, shape=False,
               x_freq=2, jts_freq=1, num_parts=24, total_dim=128, num_layers=4)

    key = jax.random.PRNGKey(0)
    kx, kj, kp = jax.random.split(key, 3)
    x = jax.random.normal(kx, (B, N, 3), jnp.float32)                 # query points
    jts = jax.random.uniform(kj, (B, N, cfg['num_parts']), jnp.float32)
    params = make_params(kp, cfg)

    ref = jax.block_until_ready(weight_pred_reference(x, jts, params, cfg))

    # f32 path
    out = jax.block_until_ready(weight_pred_forward(x, jts, params, cfg))
    assert out.shape == (B, N, 24), out.shape
    err = float(jnp.max(jnp.abs(out - ref)))
    assert err <= 1e-2, f"f32 path max abs error {err}"

    # bf16 MXU-input fast path (f32 accumulation / softmax)
    out_bf = jax.block_until_ready(
        weight_pred_forward(x, jts, params, cfg, use_bf16=True))
    err_bf = float(jnp.max(jnp.abs(out_bf - ref)))
    assert err_bf <= 5e-2, f"bf16 path max abs error {err_bf}"

    print("KERNEL_OK")
</pallas_src>

<mosaic_0001>
module attributes {stable_mosaic.version = 11 : i64} {
  func.func @weight_pred_mlp_kernel(%arg0: i32, %arg1: memref<128x128xf32, #tpu.memory_space<vmem>>, %arg2: memref<128x128xf32, #tpu.memory_space<vmem>>, %arg3: memref<1x128xf32, #tpu.memory_space<vmem>>, %arg4: memref<2x128x128xf32, #tpu.memory_space<vmem>>, %arg5: memref<2x1x128xf32, #tpu.memory_space<vmem>>, %arg6: memref<128x24xf32, #tpu.memory_space<vmem>>, %arg7: memref<1x24xf32, #tpu.memory_space<vmem>>, %arg8: memref<128x24xf32, #tpu.memory_space<vmem>>) attributes {dimension_semantics = [#tpu.dimension_semantics<parallel>], iteration_bounds = array<i64: 4>, scalar_prefetch = 0 : i64, scratch_operands = 0 : i64, tpu.core_type = #tpu.core_type<tc>, window_params = [{transform_indices = @transform_0, window_bounds = array<i64: 128, 128>}, {pipeline_mode = #tpu.pipeline_mode<synchronous>, transform_indices = @transform_1, window_bounds = array<i64: 128, 128>}, {pipeline_mode = #tpu.pipeline_mode<synchronous>, transform_indices = @transform_2, window_bounds = array<i64: 1, 128>}, {pipeline_mode = #tpu.pipeline_mode<synchronous>, transform_indices = @transform_3, window_bounds = array<i64: 2, 128, 128>}, {pipeline_mode = #tpu.pipeline_mode<synchronous>, transform_indices = @transform_4, window_bounds = array<i64: 2, 1, 128>}, {pipeline_mode = #tpu.pipeline_mode<synchronous>, transform_indices = @transform_5, window_bounds = array<i64: 128, 24>}, {pipeline_mode = #tpu.pipeline_mode<synchronous>, transform_indices = @transform_6, window_bounds = array<i64: 1, 24>}, {transform_indices = @transform_7, window_bounds = array<i64: 128, 24>}]} {
    %c0 = arith.constant 0 : index
    %c0_0 = arith.constant 0 : index
    %0 = vector.load %arg1[%c0, %c0_0] : memref<128x128xf32, #tpu.memory_space<vmem>>, vector<128x128xf32>
    %c0_1 = arith.constant 0 : index
    %c0_2 = arith.constant 0 : index
    %1 = vector.load %arg2[%c0_1, %c0_2] : memref<128x128xf32, #tpu.memory_space<vmem>>, vector<128x128xf32>
    %cst = arith.constant dense<0.000000e+00> : vector<128x128xf32>
    %2 = tpu.matmul %0, %1, %cst {dimension_numbers = #tpu.dot_dimension_numbers<[1], [0], [0], [1], [0, 0, 1, 1], [], []>} : vector<128x128xf32>, vector<128x128xf32>, vector<128x128xf32> -> vector<128x128xf32>
    %c0_3 = arith.constant 0 : index
    %c0_4 = arith.constant 0 : index
    %3 = vector.load %arg3[%c0_3, %c0_4] : memref<1x128xf32, #tpu.memory_space<vmem>>, vector<1x128xf32>
    %4 = vector.broadcast %3 : vector<1x128xf32> to vector<128x128xf32>
    %5 = arith.addf %2, %4 : vector<128x128xf32>
    %cst_5 = arith.constant 0.000000e+00 : f32
    %6 = vector.broadcast %cst_5 : f32 to vector<128x128xf32>
    %7 = arith.cmpf oge, %5, %6 : vector<128x128xf32>
    %cst_6 = arith.constant 1.000000e-01 : f32
    %8 = vector.broadcast %cst_6 : f32 to vector<128x128xf32>
    %9 = arith.mulf %8, %5 : vector<128x128xf32>
    %10 = arith.select %7, %5, %9 : vector<128x128xi1>, vector<128x128xf32>
    %c0_7 = arith.constant 0 : index
    %c0_8 = arith.constant 0 : index
    %c0_9 = arith.constant 0 : index
    %11 = vector.load %arg4[%c0_7, %c0_8, %c0_9] : memref<2x128x128xf32, #tpu.memory_space<vmem>>, vector<1x128x128xf32>
    %12 = vector.shape_cast %11 : vector<1x128x128xf32> to vector<128x128xf32>
    %cst_10 = arith.constant dense<0.000000e+00> : vector<128x128xf32>
    %13 = tpu.matmul %10, %12, %cst_10 {dimension_numbers = #tpu.dot_dimension_numbers<[1], [0], [0], [1], [0, 0, 1, 1], [], []>} : vector<128x128xf32>, vector<128x128xf32>, vector<128x128xf32> -> vector<128x128xf32>
    %c0_11 = arith.constant 0 : index
    %c0_12 = arith.constant 0 : index
    %c0_13 = arith.constant 0 : index
    %14 = vector.load %arg5[%c0_11, %c0_12, %c0_13] : memref<2x1x128xf32, #tpu.memory_space<vmem>>, vector<1x1x128xf32>
    %15 = vector.shape_cast %14 : vector<1x1x128xf32> to vector<1x128xf32>
    %16 = vector.broadcast %15 : vector<1x128xf32> to vector<128x128xf32>
    %17 = arith.addf %13, %16 : vector<128x128xf32>
    %18 = arith.addf %17, %10 : vector<128x128xf32>
    %cst_14 = arith.constant 0.000000e+00 : f32
    %19 = vector.broadcast %cst_14 : f32 to vector<128x128xf32>
    %20 = arith.cmpf oge, %18, %19 : vector<128x128xf32>
    %cst_15 = arith.constant 1.000000e-01 : f32
    %21 = vector.broadcast %cst_15 : f32 to vector<128x128xf32>
    %22 = arith.mulf %21, %18 : vector<128x128xf32>
    %23 = arith.select %20, %18, %22 : vector<128x128xi1>, vector<128x128xf32>
    %c1 = arith.constant 1 : index
    %c0_16 = arith.constant 0 : index
    %c0_17 = arith.constant 0 : index
    %24 = vector.load %arg4[%c1, %c0_16, %c0_17] : memref<2x128x128xf32, #tpu.memory_space<vmem>>, vector<1x128x128xf32>
    %25 = vector.shape_cast %24 : vector<1x128x128xf32> to vector<128x128xf32>
    %cst_18 = arith.constant dense<0.000000e+00> : vector<128x128xf32>
    %26 = tpu.matmul %23, %25, %cst_18 {dimension_numbers = #tpu.dot_dimension_numbers<[1], [0], [0], [1], [0, 0, 1, 1], [], []>} : vector<128x128xf32>, vector<128x128xf32>, vector<128x128xf32> -> vector<128x128xf32>
    %c1_19 = arith.constant 1 : index
    %c0_20 = arith.constant 0 : index
    %c0_21 = arith.constant 0 : index
    %27 = vector.load %arg5[%c1_19, %c0_20, %c0_21] : memref<2x1x128xf32, #tpu.memory_space<vmem>>, vector<1x1x128xf32>
    %28 = vector.shape_cast %27 : vector<1x1x128xf32> to vector<1x128xf32>
    %29 = vector.broadcast %28 : vector<1x128xf32> to vector<128x128xf32>
    %30 = arith.addf %26, %29 : vector<128x128xf32>
    %31 = arith.addf %30, %23 : vector<128x128xf32>
    %cst_22 = arith.constant 0.000000e+00 : f32
    %32 = vector.broadcast %cst_22 : f32 to vector<128x128xf32>
    %33 = arith.cmpf oge, %31, %32 : vector<128x128xf32>
    %cst_23 = arith.constant 1.000000e-01 : f32
    %34 = vector.broadcast %cst_23 : f32 to vector<128x128xf32>
    %35 = arith.mulf %34, %31 : vector<128x128xf32>
    %36 = arith.select %33, %31, %35 : vector<128x128xi1>, vector<128x128xf32>
    %c0_24 = arith.constant 0 : index
    %c0_25 = arith.constant 0 : index
    %37 = vector.load %arg6[%c0_24, %c0_25] : memref<128x24xf32, #tpu.memory_space<vmem>>, vector<128x24xf32>
    %cst_26 = arith.constant dense<0.000000e+00> : vector<128x24xf32>
    %38 = tpu.matmul %36, %37, %cst_26 {dimension_numbers = #tpu.dot_dimension_numbers<[1], [0], [0], [1], [0, 0, 1, 1], [], []>} : vector<128x128xf32>, vector<128x24xf32>, vector<128x24xf32> -> vector<128x24xf32>
    %c0_27 = arith.constant 0 : index
    %c0_28 = arith.constant 0 : index
    %39 = vector.load %arg7[%c0_27, %c0_28] : memref<1x24xf32, #tpu.memory_space<vmem>>, vector<1x24xf32>
    %40 = vector.broadcast %39 : vector<1x24xf32> to vector<128x24xf32>
    %41 = arith.addf %38, %40 : vector<128x24xf32>
    %cst_29 = arith.constant dense<0xFF800000> : vector<128xf32>
    %42 = vector.multi_reduction <maximumf>, %41, %cst_29 [1] : vector<128x24xf32> to vector<128xf32>
    %43 = vector.shape_cast %42 : vector<128xf32> to vector<128x1xf32>
    %44 = vector.broadcast %43 : vector<128x1xf32> to vector<128x24xf32>
    %45 = arith.subf %41, %44 : vector<128x24xf32>
    %46 = math.exp %45 : vector<128x24xf32>
    %cst_30 = arith.constant dense<0.000000e+00> : vector<128xf32>
    %47 = vector.multi_reduction <add>, %46, %cst_30 [1] : vector<128x24xf32> to vector<128xf32>
    %48 = vector.shape_cast %47 : vector<128xf32> to vector<128x1xf32>
    %49 = vector.broadcast %48 : vector<128x1xf32> to vector<128x24xf32>
    %50 = arith.divf %46, %49 : vector<128x24xf32>
    %c0_31 = arith.constant 0 : index
    %c0_32 = arith.constant 0 : index
    %51 = vector.load %arg8[%c0_31, %c0_32] : memref<128x24xf32, #tpu.memory_space<vmem>>, vector<128x24xf32>
    tpu.vector_store %arg8[%c0_31, %c0_32], %50 {strides = array<i32>} : memref<128x24xf32, #tpu.memory_space<vmem>>, vector<128x24xf32>,
    return
  }
  func.func @transform_0(%arg0: i32) -> (i32, i32) {
    %c0_i32 = arith.constant 0 : i32
    %c0_i32_0 = arith.constant 0 : i32
    return %arg0, %c0_i32 : i32, i32
  }
  func.func @transform_1(%arg0: i32) -> (i32, i32) {
    %c0_i32 = arith.constant 0 : i32
    %c0_i32_0 = arith.constant 0 : i32
    %c0_i32_1 = arith.constant 0 : i32
    return %c0_i32, %c0_i32_0 : i32, i32
  }
  func.func @transform_2(%arg0: i32) -> (i32, i32) {
    %c0_i32 = arith.constant 0 : i32
    %c0_i32_0 = arith.constant 0 : i32
    %c0_i32_1 = arith.constant 0 : i32
    return %c0_i32, %c0_i32_0 : i32, i32
  }
  func.func @transform_3(%arg0: i32) -> (i32, i32, i32) {
    %c0_i32 = arith.constant 0 : i32
    %c0_i32_0 = arith.constant 0 : i32
    %c0_i32_1 = arith.constant 0 : i32
    %c0_i32_2 = arith.constant 0 : i32
    return %c0_i32, %c0_i32_0, %c0_i32_1 : i32, i32, i32
  }
  func.func @transform_4(%arg0: i32) -> (i32, i32, i32) {
    %c0_i32 = arith.constant 0 : i32
    %c0_i32_0 = arith.constant 0 : i32
    %c0_i32_1 = arith.constant 0 : i32
    %c0_i32_2 = arith.constant 0 : i32
    return %c0_i32, %c0_i32_0, %c0_i32_1 : i32, i32, i32
  }
  func.func @transform_5(%arg0: i32) -> (i32, i32) {
    %c0_i32 = arith.constant 0 : i32
    %c0_i32_0 = arith.constant 0 : i32
    %c0_i32_1 = arith.constant 0 : i32
    return %c0_i32, %c0_i32_0 : i32, i32
  }
  func.func @transform_6(%arg0: i32) -> (i32, i32) {
    %c0_i32 = arith.constant 0 : i32
    %c0_i32_0 = arith.constant 0 : i32
    %c0_i32_1 = arith.constant 0 : i32
    return %c0_i32, %c0_i32_0 : i32, i32
  }
  func.func @transform_7(%arg0: i32) -> (i32, i32) {
    %c0_i32 = arith.constant 0 : i32
    %c0_i32_0 = arith.constant 0 : i32
    return %arg0, %c0_i32 : i32, i32
  }
}

</mosaic_0001>

<llo_original>
// kernel: tpu_custom_call.1
$region0: #{tpu_custom_call.1}
  #allocation0 [shape = 'u32[]', space=smem, size = 0x4, offset = 0x4, fixed_abs, tag = 'smem constant byte address 0x4 - core index']
  #allocation1 [shape = 'u32[144,128]{1,0:T(1,128)}', space=vmem, size = 0x12000, scoped, tag = 'internal scratch']
  %s0 = inlined_call_operand.hbm [shape: f32[512,128], index: 0, kind: input, shape index: {}]
  %s1 = inlined_call_operand.vmem [shape: f32[128,128], index: 1, kind: input, shape index: {}]
  %s2 = inlined_call_operand.vmem [shape: f32[1,128], index: 2, kind: input, shape index: {}]
  %s3 = inlined_call_operand.hbm [shape: f32[2,128,128], index: 3, kind: input, shape index: {}]
  %s4 = inlined_call_operand.vmem [shape: f32[2,1,128], index: 4, kind: input, shape index: {}]
  %s5 = inlined_call_operand.vmem [shape: f32[128,24], index: 5, kind: input, shape index: {}]
  %s6 = inlined_call_operand.vmem [shape: f32[1,24], index: 6, kind: input, shape index: {}]
  %s7 = inlined_call_operand.vmem [shape: f32[512,24], index: 7, kind: output, shape index: {}]
  %s8 = sld [smem:[#allocation0]]
  $region69: #{tpu_custom_call.1} parent=0
    _
  %s10 = ssub.s32 1, %s8
  %s11 = scalar_select 0, %s10, %s8
  $region1: #{tpu_custom_call.1} parent=0
    #allocation2 [shape = 'u8[131072]{0}', space=vmem, size = 0x20000, scoped, tag = 'input window, operand 0']
    #allocation3 [shape = 's32[2]{0}', space=sflag, size = 0x8, scoped, tag = 'scoped memory for tpu_custom_call.1']
    #allocation4 [shape = 'u8[131072]{0}', space=vmem, size = 0x20000, scoped, tag = 'input window, operand 3, single buffered']
    #allocation5 [shape = 's32[1]{0}', space=sflag, size = 0x4, scoped, tag = 'scoped memory for tpu_custom_call.1']
    %12 = vsyncpa [#allocation3], 0
    %s13 = scalar_lea.sflag [#allocation3], 1
    %14 = vsyncpa %s13, 0
    %15 = vsyncpa [#allocation5], 0
    loop: start=0, step=1, limit=6
    $region2: #{tpu_custom_call.1} parent=1 // loop_pre_header
      _
    $region3: #{tpu_custom_call.1} parent=1 // loop_header
      %s17 = sphi 0, %s21
      %p18 = scmp.ge.s32.totalorder %s17, 6
      %s27 = sphi 0, %s29
      %s30 = sphi 0, %s27
      %s31 = sphi 0, %s30
      %s47 = sphi 0, %s31
      %s51 = sphi 0, %s51
      %s53 = sphi 0, %s51
      %s54 = sphi 0, %s53
      %s68 = sphi 0, %s54
      %s72 = sphi 0, %s72
      %s74 = sphi 0, %s72
      %s75 = sphi 0, %s74
      %s89 = sphi 0, %s75
      %s93 = sphi 0, %s93
      %s95 = sphi 0, %s93
      %s96 = sphi 0, %s95
      %s110 = sphi 0, %s96
      %s114 = sphi 0, %s114
      %s116 = sphi 0, %s114
      %s117 = sphi 0, %s116
      %s131 = sphi 0, %s117
      %s135 = sphi 0, %s135
      %s137 = sphi 0, %s135
      %s138 = sphi 0, %s137
      %s152 = sphi 0, %s138
      %s156 = sphi 0, %s156
      %s158 = sphi 0, %s156
      %s159 = sphi 0, %s158
      %s173 = sphi 0, %s159
      %s179 = sphi 0, %s181
      %s182 = sphi 0, %s179
      %s183 = sphi 0, %s182
      %s199 = sphi 0, %s183
    $region4: #{tpu_custom_call.1} parent=1 // loop_header_branch
      %20 = sbr.rel (%p18) target = $region8
    $region5: #{tpu_custom_call.1} parent=1 // loop_body
      %s22 = ssub.s32 %s17, 1
      %s23 = ssub.s32 %s17, 2
      %s24 = sadd.s32 %s17, 1
      %s25 = ssub.s32 %s17, %s24
      %p26 = scmp.eq.s32.totalorder %s25, 0
      %s28 = sadd.s32 %s27, 1
      %s29 = scalar_select %p26, %s27, %s28
      %p32 = pneg %p26
      %p33 = scmp.eq.s32.totalorder %s17, 3
      %p34 = por %p32, %p33
      %p35 = scmp.ne.s32.totalorder %s27, %s30
      %p36 = scmp.eq.s32.totalorder %s17, 0
      %p37 = por %p35, %p36
      %p38 = scmp.ne.s32.totalorder %s27, %s30
      %p39 = scmp.eq.s32.totalorder %s22, 3
      %p40 = por %p38, %p39
      %p41 = scmp.ne.s32.totalorder %s30, %s31
      %p42 = scmp.eq.s32.totalorder %s22, 0
      %p43 = por %p41, %p42
      %p44 = scmp.ne.s32.totalorder %s30, %s31
      %p45 = scmp.eq.s32.totalorder %s23, 3
      %p46 = por %p44, %p45
      %p48 = scmp.ne.s32.totalorder %s31, %s47
      %p49 = scmp.eq.s32.totalorder %s23, 0
      %p50 = por %p48, %p49
      %s52 = sadd.s32 %s51, 1
      %p55 = scmp.eq.s32.totalorder %s17, 3
      %p56 = scmp.ne.s32.totalorder %s51, %s53
      %p57 = scmp.eq.s32.totalorder %s17, 0
      %p58 = por %p56, %p57
      %p59 = scmp.ne.s32.totalorder %s51, %s53
      %p60 = scmp.eq.s32.totalorder %s22, 3
      %p61 = por %p59, %p60
      %p62 = scmp.ne.s32.totalorder %s53, %s54
      %p63 = scmp.eq.s32.totalorder %s22, 0
      %p64 = por %p62, %p63
      %p65 = scmp.ne.s32.totalorder %s53, %s54
      %p66 = scmp.eq.s32.totalorder %s23, 3
      %p67 = por %p65, %p66
      %p69 = scmp.ne.s32.totalorder %s54, %s68
      %p70 = scmp.eq.s32.totalorder %s23, 0
      %p71 = por %p69, %p70
      %s73 = sadd.s32 %s72, 1
      %p76 = scmp.eq.s32.totalorder %s17, 3
      %p77 = scmp.ne.s32.totalorder %s72, %s74
      %p78 = scmp.eq.s32.totalorder %s17, 0
      %p79 = por %p77, %p78
      %p80 = scmp.ne.s32.totalorder %s72, %s74
      %p81 = scmp.eq.s32.totalorder %s22, 3
      %p82 = por %p80, %p81
      %p83 = scmp.ne.s32.totalorder %s74, %s75
      %p84 = scmp.eq.s32.totalorder %s22, 0
      %p85 = por %p83, %p84
      %p86 = scmp.ne.s32.totalorder %s74, %s75
      %p87 = scmp.eq.s32.totalorder %s23, 3
      %p88 = por %p86, %p87
      %p90 = scmp.ne.s32.totalorder %s75, %s89
      %p91 = scmp.eq.s32.totalorder %s23, 0
      %p92 = por %p90, %p91
      %s94 = sadd.s32 %s93, 1
      %p97 = scmp.eq.s32.totalorder %s17, 3
      %p98 = scmp.ne.s32.totalorder %s93, %s95
      %p99 = scmp.eq.s32.totalorder %s17, 0
      %p100 = por %p98, %p99
      %p101 = scmp.ne.s32.totalorder %s93, %s95
      %p102 = scmp.eq.s32.totalorder %s22, 3
      %p103 = por %p101, %p102
      %p104 = scmp.ne.s32.totalorder %s95, %s96
      %p105 = scmp.eq.s32.totalorder %s22, 0
      %p106 = por %p104, %p105
      %p107 = scmp.ne.s32.totalorder %s95, %s96
      %p108 = scmp.eq.s32.totalorder %s23, 3
      %p109 = por %p107, %p108
      %p111 = scmp.ne.s32.totalorder %s96, %s110
      %p112 = scmp.eq.s32.totalorder %s23, 0
      %p113 = por %p111, %p112
      %s115 = sadd.s32 %s114, 1
      %p118 = scmp.eq.s32.totalorder %s17, 3
      %p119 = scmp.ne.s32.totalorder %s114, %s116
      %p120 = scmp.eq.s32.totalorder %s17, 0
      %p121 = por %p119, %p120
      %p122 = scmp.ne.s32.totalorder %s114, %s116
      %p123 = scmp.eq.s32.totalorder %s22, 3
      %p124 = por %p122, %p123
      %p125 = scmp.ne.s32.totalorder %s116, %s117
      %p126 = scmp.eq.s32.totalorder %s22, 0
      %p127 = por %p125, %p126
      %p128 = scmp.ne.s32.totalorder %s116, %s117
      %p129 = scmp.eq.s32.totalorder %s23, 3
      %p130 = por %p128, %p129
      %p132 = scmp.ne.s32.totalorder %s117, %s131
      %p133 = scmp.eq.s32.totalorder %s23, 0
      %p134 = por %p132, %p133
      %s136 = sadd.s32 %s135, 1
      %p139 = scmp.eq.s32.totalorder %s17, 3
      %p140 = scmp.ne.s32.totalorder %s135, %s137
      %p141 = scmp.eq.s32.totalorder %s17, 0
      %p142 = por %p140, %p141
      %p143 = scmp.ne.s32.totalorder %s135, %s137
      %p144 = scmp.eq.s32.totalorder %s22, 3
      %p145 = por %p143, %p144
      %p146 = scmp.ne.s32.totalorder %s137, %s138
      %p147 = scmp.eq.s32.totalorder %s22, 0
      %p148 = por %p146, %p147
      %p149 = scmp.ne.s32.totalorder %s137, %s138
      %p150 = scmp.eq.s32.totalorder %s23, 3
      %p151 = por %p149, %p150
      %p153 = scmp.ne.s32.totalorder %s138, %s152
      %p154 = scmp.eq.s32.totalorder %s23, 0
      %p155 = por %p153, %p154
      %s157 = sadd.s32 %s156, 1
      %p160 = scmp.eq.s32.totalorder %s17, 3
      %p161 = scmp.ne.s32.totalorder %s156, %s158
      %p162 = scmp.eq.s32.totalorder %s17, 0
      %p163 = por %p161, %p162
      %p164 = scmp.ne.s32.totalorder %s156, %s158
      %p165 = scmp.eq.s32.totalorder %s22, 3
      %p166 = por %p164, %p165
      %p167 = scmp.ne.s32.totalorder %s158, %s159
      %p168 = scmp.eq.s32.totalorder %s22, 0
      %p169 = por %p167, %p168
      %p170 = scmp.ne.s32.totalorder %s158, %s159
      %p171 = scmp.eq.s32.totalorder %s23, 3
      %p172 = por %p170, %p171
      %p174 = scmp.ne.s32.totalorder %s159, %s173
      %p175 = scmp.eq.s32.totalorder %s23, 0
      %p176 = por %p174, %p175
      %s177 = ssub.s32 %s17, %s24
      %p178 = scmp.eq.s32.totalorder %s177, 0
      %s180 = sadd.s32 %s179, 1
      %s181 = scalar_select %p178, %s179, %s180
      %p184 = pneg %p178
      %p185 = scmp.eq.s32.totalorder %s17, 3
      %p186 = por %p184, %p185
      %p187 = scmp.ne.s32.totalorder %s179, %s182
      %p188 = scmp.eq.s32.totalorder %s17, 0
      %p189 = por %p187, %p188
      %p190 = scmp.ne.s32.totalorder %s179, %s182
      %p191 = scmp.eq.s32.totalorder %s22, 3
      %p192 = por %p190, %p191
      %p193 = scmp.ne.s32.totalorder %s182, %s183
      %p194 = scmp.eq.s32.totalorder %s22, 0
      %p195 = por %p193, %p194
      %p196 = scmp.ne.s32.totalorder %s182, %s183
      %p197 = scmp.eq.s32.totalorder %s23, 3
      %p198 = por %p196, %p197
      %p200 = scmp.ne.s32.totalorder %s183, %s199
      %p201 = scmp.eq.s32.totalorder %s23, 0
      %p202 = por %p200, %p201
      %p203 = scmp.le.s32.totalorder 1, %s17
      %p204 = scmp.lt.s32.totalorder %s17, 5
      %p205 = pnand %p203, %p204
      %p206 = pneg %p205
      // Predicated region
      $region9: #{tpu_custom_call.1} parent=5 // pred_check
        _
      $region10: #{tpu_custom_call.1} parent=5 // pred_check_branch
        %208 = sbr.rel (%p205) target = $region12
      $region11: #{tpu_custom_call.1} parent=5 // pred_region
        %s209 = ssub.s32 %s17, 1
        // Predicated region
        $region13: #{tpu_custom_call.1} parent=11 // pred_check
          %p210 = pneg %p64
        $region14: #{tpu_custom_call.1} parent=11 // pred_check_branch
          %212 = sbr.rel (%p210) target = $region16
        $region15: #{tpu_custom_call.1} parent=11 // pred_region
          _
        $region16: #{tpu_custom_call.1} parent=11 // pred_fallthru
          _
        // Predicated region
        $region17: #{tpu_custom_call.1} parent=11 // pred_check
          %p213 = pneg %p85
        $region18: #{tpu_custom_call.1} parent=11 // pred_check_branch
          %215 = sbr.rel (%p213) target = $region20
        $region19: #{tpu_custom_call.1} parent=11 // pred_region
          _
        $region20: #{tpu_custom_call.1} parent=11 // pred_fallthru
          _
        // Predicated region
        $region21: #{tpu_custom_call.1} parent=11 // pred_check
          %p216 = pneg %p106
        $region22: #{tpu_custom_call.1} parent=11 // pred_check_branch
          %218 = sbr.rel (%p216) target = $region24
        $region23: #{tpu_custom_call.1} parent=11 // pred_region
          %s220 = ssub.s32 4096, 4096
          %221 = vsyncadd [#allocation5], %s220
          %s222 = sshll.u32 [#allocation4], 4
          %s223 = int_to_ptr.vmem [resolvable:$true] %s222
          %228 = dma.hbm_to_vmem [thread:$0]  %s3, 4096, %s223, [#allocation5], 128, 128, 8
        $region24: #{tpu_custom_call.1} parent=11 // pred_fallthru
          _
        // Predicated region
        $region25: #{tpu_custom_call.1} parent=11 // pred_check
          %p229 = pneg %p127
        $region26: #{tpu_custom_call.1} parent=11 // pred_check_branch
          %231 = sbr.rel (%p229) target = $region28
        $region27: #{tpu_custom_call.1} parent=11 // pred_region
          _
        $region28: #{tpu_custom_call.1} parent=11 // pred_fallthru
          _
        // Predicated region
        $region29: #{tpu_custom_call.1} parent=11 // pred_check
          %p232 = pneg %p148
        $region30: #{tpu_custom_call.1} parent=11 // pred_check_branch
          %234 = sbr.rel (%p232) target = $region32
        $region31: #{tpu_custom_call.1} parent=11 // pred_region
          _
        $region32: #{tpu_custom_call.1} parent=11 // pred_fallthru
          _
        // Predicated region
        $region33: #{tpu_custom_call.1} parent=11 // pred_check
          %p235 = pneg %p169
        $region34: #{tpu_custom_call.1} parent=11 // pred_check_branch
          %237 = sbr.rel (%p235) target = $region36
        $region35: #{tpu_custom_call.1} parent=11 // pred_region
          _
        $region36: #{tpu_custom_call.1} parent=11 // pred_fallthru
          _
      $region12: #{tpu_custom_call.1} parent=5 // pred_fallthru
        _
      %p238 = scmp.lt.s32.totalorder %s17, 4
      // Predicated region
      $region37: #{tpu_custom_call.1} parent=5 // pred_check
        %p239 = pneg %p238
      $region38: #{tpu_custom_call.1} parent=5 // pred_check_branch
        %241 = sbr.rel (%p239) target = $region40
      $region39: #{tpu_custom_call.1} parent=5 // pred_region
        // Predicated region
        $region41: #{tpu_custom_call.1} parent=39 // pred_check
          %p242 = pneg %p37
        $region42: #{tpu_custom_call.1} parent=39 // pred_check_branch
          %244 = sbr.rel (%p242) target = $region44
        $region43: #{tpu_custom_call.1} parent=39 // pred_region
          %s245 = sand.u32 %s27, 1
          %s246 = scalar_lea.sflag [#allocation3], %s245
          %s247 = sand.u32 %s27, 1
          %s248 = smul.addr %s247, 128
          %s249 = scalar_lea.vmem [#allocation2], %s248
          %s250 = smul.u32 16, %s17
          %s252 = ssub.s32 2048, 2048
          %253 = vsyncadd %s246, %s252
          %s254 = smul.addr %s250, 128
          %s255 = scalar_lea.hbm %s0, %s254
          %s256 = sshll.u32 %s249, 4
          %s257 = int_to_ptr.vmem [resolvable:$true] %s256
          %262 = dma.hbm_to_vmem [thread:$0]  %s255, 2048, %s257, %s246, 128, 128, 8
        $region44: #{tpu_custom_call.1} parent=39 // pred_fallthru
          _
      $region40: #{tpu_custom_call.1} parent=5 // pred_fallthru
        _
      %p263 = scmp.le.s32.totalorder 1, %s17
      %p264 = scmp.lt.s32.totalorder %s17, 5
      %p265 = pnand %p263, %p264
      %p266 = pneg %p265
      // Predicated region
      $region45: #{tpu_custom_call.1} parent=5 // pred_check
        _
      $region46: #{tpu_custom_call.1} parent=5 // pred_check_branch
        %268 = sbr.rel (%p265) target = $region48
      $region47: #{tpu_custom_call.1} parent=5 // pred_region
        %s269 = ssub.s32 %s17, 1
        %s270 = sand.u32 %s30, 1
        %s271 = scalar_lea.sflag [#allocation3], %s270
        %s272 = sand.u32 %s30, 1
        %s273 = smul.addr %s272, 128
        %s274 = scalar_lea.vmem [#allocation2], %s273
        // Predicated region
        $region49: #{tpu_custom_call.1} parent=47 // pred_check
          %p275 = pneg %p43
        $region50: #{tpu_custom_call.1} parent=47 // pred_check_branch
          %277 = sbr.rel (%p275) target = $region52
        $region51: #{tpu_custom_call.1} parent=47 // pred_region
          %278 = dma.done %s271, 2048
        $region52: #{tpu_custom_call.1} parent=47 // pred_fallthru
          _
        // Predicated region
        $region53: #{tpu_custom_call.1} parent=47 // pred_check
          %p279 = pneg %p106
        $region54: #{tpu_custom_call.1} parent=47 // pred_check_branch
          %281 = sbr.rel (%p279) target = $region56
        $region55: #{tpu_custom_call.1} parent=47 // pred_region
          %282 = dma.done [#allocation5], 4096
        $region56: #{tpu_custom_call.1} parent=47 // pred_fallthru
          _
        %s283 = sand.u32 %s30, 1
        %s284 = scalar_lea.sflag [#allocation3], %s283
        %s285 = sand.u32 %s30, 1
        %s286 = smul.addr %s285, 128
        %s287 = scalar_lea.vmem [#allocation2], %s286
        %p288 = pneg %p43
        %p289 = pneg %p40
        %p290 = pneg %p64
        %p291 = pneg %p61
        %p292 = pneg %p85
        %p293 = pneg %p82
        %p294 = pneg %p106
        %p295 = pneg %p103
        %p296 = pneg %p127
        %p297 = pneg %p124
        %p298 = pneg %p148
        %p299 = pneg %p145
        %p300 = pneg %p169
        %p301 = pneg %p166
        %p302 = pneg %p195
        %p303 = pneg %p192
        %s304 = smul.u32 16, %s22
        %p305 = scmp.lt.s32.totalorder %s304, 63
        %s306 = scalar_select %p305, %s304, 63
        %s307 = smul.addr %s306, 8
        %s308 = scalar_lea.vmem %s7, %s307
        %s309 = smul.u32 16, %s22
        %s310 = smul.u32 16, %s22
        %p311 = scmp.lt.s32.totalorder %s310, 63
        %s312 = scalar_select %p311, %s310, 63
        %s313 = smul.addr %s312, 8
        %s314 = scalar_lea.vmem %s7, %s313
        %s315 = smul.u32 16, %s22
        %v316 = vld [vmem:[%s274] sm:$0xff]
        %v317 = vld [vmem:[%s274 + $0x8] sm:$0xff]
        %v318 = vld [vmem:[%s274 + $0x10] sm:$0xff]
        %v319 = vld [vmem:[%s274 + $0x18] sm:$0xff]
        %v320 = vld [vmem:[%s274 + $0x20] sm:$0xff]
        %v321 = vld [vmem:[%s274 + $0x28] sm:$0xff]
        %v322 = vld [vmem:[%s274 + $0x30] sm:$0xff]
        %v323 = vld [vmem:[%s274 + $0x38] sm:$0xff]
        %v324 = vld [vmem:[%s274 + $0x40] sm:$0xff]
        %v325 = vld [vmem:[%s274 + $0x48] sm:$0xff]
        %v326 = vld [vmem:[%s274 + $0x50] sm:$0xff]
        %v327 = vld [vmem:[%s274 + $0x58] sm:$0xff]
        %v328 = vld [vmem:[%s274 + $0x60] sm:$0xff]
        %v329 = vld [vmem:[%s274 + $0x68] sm:$0xff]
        %v330 = vld [vmem:[%s274 + $0x70] sm:$0xff]
        %v331 = vld [vmem:[%s274 + $0x78] sm:$0xff]
        %v332 = vld [vmem:[%s1] sm:$0xff]
        %v333 = vld [vmem:[%s1 + $0x8] sm:$0xff]
        %v334 = vld [vmem:[%s1 + $0x10] sm:$0xff]
        %v335 = vld [vmem:[%s1 + $0x18] sm:$0xff]
        %v336 = vld [vmem:[%s1 + $0x20] sm:$0xff]
        %v337 = vld [vmem:[%s1 + $0x28] sm:$0xff]
        %v338 = vld [vmem:[%s1 + $0x30] sm:$0xff]
        %v339 = vld [vmem:[%s1 + $0x38] sm:$0xff]
        %v340 = vld [vmem:[%s1 + $0x40] sm:$0xff]
        %v341 = vld [vmem:[%s1 + $0x48] sm:$0xff]
        %v342 = vld [vmem:[%s1 + $0x50] sm:$0xff]
        %v343 = vld [vmem:[%s1 + $0x58] sm:$0xff]
        %v344 = vld [vmem:[%s1 + $0x60] sm:$0xff]
        %v345 = vld [vmem:[%s1 + $0x68] sm:$0xff]
        %v346 = vld [vmem:[%s1 + $0x70] sm:$0xff]
        %v347 = vld [vmem:[%s1 + $0x78] sm:$0xff]
        %v348 = vld [vmem:[%s2] sm:$0x1]
        %v350 = vlaneseq
        %v351 = vshrl.u32 %v350, 7
        %v352 = vsub.s32 0, %v351
        %v353 = vrot.slane %v348, %v352
        %355 = vmatprep.subr.mxu0 0.0
        %356 = vmatpush1.msra.mxu0 %v332
        %357 = vmatprep.subr.mxu0 0.0
        %358 = vmatpush1.msra.mxu0 %v333
        %359 = vmatprep.subr.mxu0 0.0
        %360 = vmatpush1.msra.mxu0 %v334
        %361 = vmatprep.subr.mxu0 0.0
        %362 = vmatpush1.msra.mxu0 %v335
        %363 = vmatprep.subr.mxu0 0.0
        %364 = vmatpush1.msra.mxu0 %v336
        %365 = vmatprep.subr.mxu0 0.0
        %366 = vmatpush1.msra.mxu0 %v337
        %367 = vmatprep.subr.mxu0 0.0
        %368 = vmatpush1.msra.mxu0 %v338
        %369 = vmatprep.subr.mxu0 0.0
        %370 = vmatpush1.msra.mxu0 %v339
        %371 = vmatprep.subr.mxu0 0.0
        %372 = vmatpush1.msra.mxu0 %v340
        %373 = vmatprep.subr.mxu0 0.0
        %374 = vmatpush1.msra.mxu0 %v341
        %375 = vmatprep.subr.mxu0 0.0
        %376 = vmatpush1.msra.mxu0 %v342
        %377 = vmatprep.subr.mxu0 0.0
        %378 = vmatpush1.msra.mxu0 %v343
        %379 = vmatprep.subr.mxu0 0.0
        %380 = vmatpush1.msra.mxu0 %v344
        %381 = vmatprep.subr.mxu0 0.0
        %382 = vmatpush1.msra.mxu0 %v345
        %383 = vmatprep.subr.mxu0 0.0
        %384 = vmatpush1.msra.mxu0 %v346
        %385 = vmatprep.subr.mxu0 0.0
        %386 = vmatpush1.msra.mxu0 %v347
        %387 = vmatprep.subr.mxu0 0.0
        %388 = vmatpush1.msra.mxu0 0.0
        %389 = vmatprep.subr.mxu0 0.0
        %390 = vmatpush1.msra.mxu0 0.0
        %391 = vmatprep.subr.mxu0 0.0
        %392 = vmatpush1.msra.mxu0 0.0
        %393 = vmatprep.subr.mxu0 0.0
        %394 = vmatpush1.msra.mxu0 0.0
        %395 = vmatprep.subr.mxu0 0.0
        %396 = vmatpush1.msra.mxu0 0.0
        %397 = vmatprep.subr.mxu0 0.0
        %398 = vmatpush1.msra.mxu0 0.0
        %399 = vmatprep.subr.mxu0 0.0
        %400 = vmatpush1.msra.mxu0 0.0
        %401 = vmatprep.subr.mxu0 0.0
        %402 = vmatpush1.msra.mxu0 0.0
        %403 = vmatprep.subr.mxu0 0.0
        %404 = vmatpush1.msra.mxu0 0.0
        %405 = vmatprep.subr.mxu0 0.0
        %406 = vmatpush1.msra.mxu0 0.0
        %407 = vmatprep.subr.mxu0 0.0
        %408 = vmatpush1.msra.mxu0 0.0
        %409 = vmatprep.subr.mxu0 0.0
        %410 = vmatpush1.msra.mxu0 0.0
        %411 = vmatprep.subr.mxu0 0.0
        %412 = vmatpush1.msra.mxu0 0.0
        %413 = vmatprep.subr.mxu0 0.0
        %414 = vmatpush1.msra.mxu0 0.0
        %415 = vmatprep.subr.mxu0 0.0
        %416 = vmatpush1.msra.mxu0 0.0
        %417 = vmatprep.subr.mxu0 0.0
        %418 = vmatpush1.msra.mxu0 0.0
        %419 = vmatprep.mubr.f32.mxu0 0.0
        %420 = vmatmul.mubr.f32.gmra.mrb[0].mxu0 %v316
        %v421 = vpop.f32.mrb[0].mxu0
        %v422 = vadd.f32 %v353, %v421
        %v423 = vpop.f32.mrb[0].mxu0
        %424 = vmatprep.mubr.f32.mxu0 0.0
        %425 = vmatmul.mubr.f32.gmra.mrb[0].mxu0 %v317
        %v426 = vpop.f32.mrb[0].mxu0
        %v427 = vadd.f32 %v353, %v426
        %v428 = vpop.f32.mrb[0].mxu0
        %429 = vmatprep.mubr.f32.mxu0 0.0
        %430 = vmatmul.mubr.f32.gmra.mrb[0].mxu0 %v318
        %v431 = vpop.f32.mrb[0].mxu0
        %v432 = vadd.f32 %v353, %v431
        %v433 = vpop.f32.mrb[0].mxu0
        %434 = vmatprep.mubr.f32.mxu0 0.0
        %435 = vmatmul.mubr.f32.gmra.mrb[0].mxu0 %v319
        %v436 = vpop.f32.mrb[0].mxu0
        %v437 = vadd.f32 %v353, %v436
        %v438 = vpop.f32.mrb[0].mxu0
        %439 = vmatprep.mubr.f32.mxu0 0.0
        %440 = vmatmul.mubr.f32.gmra.mrb[0].mxu0 %v320
        %v441 = vpop.f32.mrb[0].mxu0
        %v442 = vadd.f32 %v353, %v441
        %v443 = vpop.f32.mrb[0].mxu0
        %444 = vmatprep.mubr.f32.mxu0 0.0
        %445 = vmatmul.mubr.f32.gmra.mrb[0].mxu0 %v321
        %v446 = vpop.f32.mrb[0].mxu0
        %v447 = vadd.f32 %v353, %v446
        %v448 = vpop.f32.mrb[0].mxu0
        %449 = vmatprep.mubr.f32.mxu0 0.0
        %450 = vmatmul.mubr.f32.gmra.mrb[0].mxu0 %v322
        %v451 = vpop.f32.mrb[0].mxu0
        %v452 = vadd.f32 %v353, %v451
        %v453 = vpop.f32.mrb[0].mxu0
        %454 = vmatprep.mubr.f32.mxu0 0.0
        %455 = vmatmul.mubr.f32.gmra.mrb[0].mxu0 %v323
        %v456 = vpop.f32.mrb[0].mxu0
        %v457 = vadd.f32 %v353, %v456
        %v458 = vpop.f32.mrb[0].mxu0
        %459 = vmatprep.mubr.f32.mxu0 0.0
        %460 = vmatmul.mubr.f32.gmra.mrb[0].mxu0 %v324
        %v461 = vpop.f32.mrb[0].mxu0
        %v462 = vadd.f32 %v353, %v461
        %v463 = vpop.f32.mrb[0].mxu0
        %464 = vmatprep.mubr.f32.mxu0 0.0
        %465 = vmatmul.mubr.f32.gmra.mrb[0].mxu0 %v325
        %v466 = vpop.f32.mrb[0].mxu0
        %v467 = vadd.f32 %v353, %v466
        %v468 = vpop.f32.mrb[0].mxu0
        %469 = vmatprep.mubr.f32.mxu0 0.0
        %470 = vmatmul.mubr.f32.gmra.mrb[0].mxu0 %v326
        %v471 = vpop.f32.mrb[0].mxu0
        %v472 = vadd.f32 %v353, %v471
        %v473 = vpop.f32.mrb[0].mxu0
        %474 = vmatprep.mubr.f32.mxu0 0.0
        %475 = vmatmul.mubr.f32.gmra.mrb[0].mxu0 %v327
        %v476 = vpop.f32.mrb[0].mxu0
        %v477 = vadd.f32 %v353, %v476
        %v478 = vpop.f32.mrb[0].mxu0
        %479 = vmatprep.mubr.f32.mxu0 0.0
        %480 = vmatmul.mubr.f32.gmra.mrb[0].mxu0 %v328
        %v481 = vpop.f32.mrb[0].mxu0
        %v482 = vadd.f32 %v353, %v481
        %v483 = vpop.f32.mrb[0].mxu0
        %484 = vmatprep.mubr.f32.mxu0 0.0
        %485 = vmatmul.mubr.f32.gmra.mrb[0].mxu0 %v329
        %v486 = vpop.f32.mrb[0].mxu0
        %v487 = vadd.f32 %v353, %v486
        %v488 = vpop.f32.mrb[0].mxu0
        %489 = vmatprep.mubr.f32.mxu0 0.0
        %490 = vmatmul.mubr.f32.gmra.mrb[0].mxu0 %v330
        %v491 = vpop.f32.mrb[0].mxu0
        %v492 = vadd.f32 %v353, %v491
        %v493 = vpop.f32.mrb[0].mxu0
        %494 = vmatprep.mubr.f32.mxu0 0.0
        %495 = vmatmul.mubr.f32.gmra.mrb[0].mxu0 %v331
        %v496 = vpop.f32.mrb[0].mxu0
        %v497 = vadd.f32 %v353, %v496
        %v498 = vpop.f32.mrb[0].mxu0
        %499 = vdwg.mxu0
        %vm500 = vcmp.ge.f32.partialorder %v422, 0.0
        %vm501 = vcmp.ge.f32.partialorder %v427, 0.0
        %vm502 = vcmp.ge.f32.partialorder %v432, 0.0
        %vm503 = vcmp.ge.f32.partialorder %v437, 0.0
        %vm504 = vcmp.ge.f32.partialorder %v442, 0.0
        %vm505 = vcmp.ge.f32.partialorder %v447, 0.0
        %vm506 = vcmp.ge.f32.partialorder %v452, 0.0
        %vm507 = vcmp.ge.f32.partialorder %v457, 0.0
        %vm508 = vcmp.ge.f32.partialorder %v462, 0.0
        %vm509 = vcmp.ge.f32.partialorder %v467, 0.0
        %vm510 = vcmp.ge.f32.partialorder %v472, 0.0
        %vm511 = vcmp.ge.f32.partialorder %v477, 0.0
        %vm512 = vcmp.ge.f32.partialorder %v482, 0.0
        %vm513 = vcmp.ge.f32.partialorder %v487, 0.0
        %vm514 = vcmp.ge.f32.partialorder %v492, 0.0
        %vm515 = vcmp.ge.f32.partialorder %v497, 0.0
        %v516 = vmul.f32 %v422, 0.1
        %v517 = vmul.f32 %v427, 0.1
        %v518 = vmul.f32 %v432, 0.1
        %v519 = vmul.f32 %v437, 0.1
        %v520 = vmul.f32 %v442, 0.1
        %v521 = vmul.f32 %v447, 0.1
        %v522 = vmul.f32 %v452, 0.1
        %v523 = vmul.f32 %v457, 0.1
        %v524 = vmul.f32 %v462, 0.1
        %v525 = vmul.f32 %v467, 0.1
        %v526 = vmul.f32 %v472, 0.1
        %v527 = vmul.f32 %v477, 0.1
        %v528 = vmul.f32 %v482, 0.1
        %v529 = vmul.f32 %v487, 0.1
        %v530 = vmul.f32 %v492, 0.1
        %v531 = vmul.f32 %v497, 0.1
        %v532 = vsel %vm500, %v422, %v516
        %v533 = vsel %vm501, %v427, %v517
        %v534 = vsel %vm502, %v432, %v518
        %v535 = vsel %vm503, %v437, %v519
        %v536 = vsel %vm504, %v442, %v520
        %v537 = vsel %vm505, %v447, %v521
        %v538 = vsel %vm506, %v452, %v522
        %v539 = vsel %vm507, %v457, %v523
        %v540 = vsel %vm508, %v462, %v524
        %v541 = vsel %vm509, %v467, %v525
        %v542 = vsel %vm510, %v472, %v526
        %v543 = vsel %vm511, %v477, %v527
        %v544 = vsel %vm512, %v482, %v528
        %v545 = vsel %vm513, %v487, %v529
        %v546 = vsel %vm514, %v492, %v530
        %v547 = vsel %vm515, %v497, %v531
        %v548 = vld [vmem:[#allocation4] sm:$0xff]
        %v549 = vld [vmem:[#allocation4 + $0x8] sm:$0xff]
        %v550 = vld [vmem:[#allocation4 + $0x10] sm:$0xff]
        %v551 = vld [vmem:[#allocation4 + $0x18] sm:$0xff]
        %v552 = vld [vmem:[#allocation4 + $0x20] sm:$0xff]
        %v553 = vld [vmem:[#allocation4 + $0x28] sm:$0xff]
        %v554 = vld [vmem:[#allocation4 + $0x30] sm:$0xff]
        %v555 = vld [vmem:[#allocation4 + $0x38] sm:$0xff]
        %v556 = vld [vmem:[#allocation4 + $0x40] sm:$0xff]
        %v557 = vld [vmem:[#allocation4 + $0x48] sm:$0xff]
        %v558 = vld [vmem:[#allocation4 + $0x50] sm:$0xff]
        %v559 = vld [vmem:[#allocation4 + $0x58] sm:$0xff]
        %v560 = vld [vmem:[#allocation4 + $0x60] sm:$0xff]
        %v561 = vld [vmem:[#allocation4 + $0x68] sm:$0xff]
        %v562 = vld [vmem:[#allocation4 + $0x70] sm:$0xff]
        %v563 = vld [vmem:[#allocation4 + $0x78] sm:$0xff]
        %v564 = vld [vmem:[%s4] sm:$0x1]
        %v566 = vlaneseq
        %v567 = vshrl.u32 %v566, 7
        %v568 = vsub.s32 0, %v567
        %v569 = vrot.slane %v564, %v568
        %571 = vmatprep.subr.mxu0 0.0
        %572 = vmatpush1.msra.mxu0 %v548
        %573 = vmatprep.subr.mxu0 0.0
        %574 = vmatpush1.msra.mxu0 %v549
        %575 = vmatprep.subr.mxu0 0.0
        %576 = vmatpush1.msra.mxu0 %v550
        %577 = vmatprep.subr.mxu0 0.0
        %578 = vmatpush1.msra.mxu0 %v551
        %579 = vmatprep.subr.mxu0 0.0
        %580 = vmatpush1.msra.mxu0 %v552
        %581 = vmatprep.subr.mxu0 0.0
        %582 = vmatpush1.msra.mxu0 %v553
        %583 = vmatprep.subr.mxu0 0.0
        %584 = vmatpush1.msra.mxu0 %v554
        %585 = vmatprep.subr.mxu0 0.0
        %586 = vmatpush1.msra.mxu0 %v555
        %587 = vmatprep.subr.mxu0 0.0
        %588 = vmatpush1.msra.mxu0 %v556
        %589 = vmatprep.subr.mxu0 0.0
        %590 = vmatpush1.msra.mxu0 %v557
        %591 = vmatprep.subr.mxu0 0.0
        %592 = vmatpush1.msra.mxu0 %v558
        %593 = vmatprep.subr.mxu0 0.0
        %594 = vmatpush1.msra.mxu0 %v559
        %595 = vmatprep.subr.mxu0 0.0
        %596 = vmatpush1.msra.mxu0 %v560
        %597 = vmatprep.subr.mxu0 0.0
        %598 = vmatpush1.msra.mxu0 %v561
        %599 = vmatprep.subr.mxu0 0.0
        %600 = vmatpush1.msra.mxu0 %v562
        %601 = vmatprep.subr.mxu0 0.0
        %602 = vmatpush1.msra.mxu0 %v563
        %603 = vmatprep.subr.mxu0 0.0
        %604 = vmatpush1.msra.mxu0 0.0
        %605 = vmatprep.subr.mxu0 0.0
        %606 = vmatpush1.msra.mxu0 0.0
        %607 = vmatprep.subr.mxu0 0.0
        %608 = vmatpush1.msra.mxu0 0.0
        %609 = vmatprep.subr.mxu0 0.0
        %610 = vmatpush1.msra.mxu0 0.0
        %611 = vmatprep.subr.mxu0 0.0
        %612 = vmatpush1.msra.mxu0 0.0
        %613 = vmatprep.subr.mxu0 0.0
        %614 = vmatpush1.msra.mxu0 0.0
        %615 = vmatprep.subr.mxu0 0.0
        %616 = vmatpush1.msra.mxu0 0.0
        %617 = vmatprep.subr.mxu0 0.0
        %618 = vmatpush1.msra.mxu0 0.0
        %619 = vmatprep.subr.mxu0 0.0
        %620 = vmatpush1.msra.mxu0 0.0
        %621 = vmatprep.subr.mxu0 0.0
        %622 = vmatpush1.msra.mxu0 0.0
        %623 = vmatprep.subr.mxu0 0.0
        %624 = vmatpush1.msra.mxu0 0.0
        %625 = vmatprep.subr.mxu0 0.0
        %626 = vmatpush1.msra.mxu0 0.0
        %627 = vmatprep.subr.mxu0 0.0
        %628 = vmatpush1.msra.mxu0 0.0
        %629 = vmatprep.subr.mxu0 0.0
        %630 = vmatpush1.msra.mxu0 0.0
        %631 = vmatprep.subr.mxu0 0.0
        %632 = vmatpush1.msra.mxu0 0.0
        %633 = vmatprep.subr.mxu0 0.0
        %634 = vmatpush1.msra.mxu0 0.0
        %635 = vmatprep.mubr.f32.mxu0 0.0
        %636 = vmatmul.mubr.f32.gmra.mrb[0].mxu0 %v532
        %v637 = vpop.f32.mrb[0].mxu0
        %v638 = vadd.f32 %v569, %v637
        %v639 = vpop.f32.mrb[0].mxu0
        %640 = vmatprep.mubr.f32.mxu0 0.0
        %641 = vmatmul.mubr.f32.gmra.mrb[0].mxu0 %v533
        %v642 = vpop.f32.mrb[0].mxu0
        %v643 = vadd.f32 %v569, %v642
        %v644 = vpop.f32.mrb[0].mxu0
        %645 = vmatprep.mubr.f32.mxu0 0.0
        %646 = vmatmul.mubr.f32.gmra.mrb[0].mxu0 %v534
        %v647 = vpop.f32.mrb[0].mxu0
        %v648 = vadd.f32 %v569, %v647
        %v649 = vpop.f32.mrb[0].mxu0
        %650 = vmatprep.mubr.f32.mxu0 0.0
        %651 = vmatmul.mubr.f32.gmra.mrb[0].mxu0 %v535
        %v652 = vpop.f32.mrb[0].mxu0
        %v653 = vadd.f32 %v569, %v652
        %v654 = vpop.f32.mrb[0].mxu0
        %655 = vmatprep.mubr.f32.mxu0 0.0
        %656 = vmatmul.mubr.f32.gmra.mrb[0].mxu0 %v536
        %v657 = vpop.f32.mrb[0].mxu0
        %v658 = vadd.f32 %v569, %v657
        %v659 = vpop.f32.mrb[0].mxu0
        %660 = vmatprep.mubr.f32.mxu0 0.0
        %661 = vmatmul.mubr.f32.gmra.mrb[0].mxu0 %v537
        %v662 = vpop.f32.mrb[0].mxu0
        %v663 = vadd.f32 %v569, %v662
        %v664 = vpop.f32.mrb[0].mxu0
        %665 = vmatprep.mubr.f32.mxu0 0.0
        %666 = vmatmul.mubr.f32.gmra.mrb[0].mxu0 %v538
        %v667 = vpop.f32.mrb[0].mxu0
        %v668 = vadd.f32 %v569, %v667
        %v669 = vpop.f32.mrb[0].mxu0
        %670 = vmatprep.mubr.f32.mxu0 0.0
        %671 = vmatmul.mubr.f32.gmra.mrb[0].mxu0 %v539
        %v672 = vpop.f32.mrb[0].mxu0
        %v673 = vadd.f32 %v569, %v672
        %v674 = vpop.f32.mrb[0].mxu0
        %675 = vmatprep.mubr.f32.mxu0 0.0
        %676 = vmatmul.mubr.f32.gmra.mrb[0].mxu0 %v540
        %v677 = vpop.f32.mrb[0].mxu0
        %v678 = vadd.f32 %v569, %v677
        %v679 = vpop.f32.mrb[0].mxu0
        %680 = vmatprep.mubr.f32.mxu0 0.0
        %681 = vmatmul.mubr.f32.gmra.mrb[0].mxu0 %v541
        %v682 = vpop.f32.mrb[0].mxu0
        %v683 = vadd.f32 %v569, %v682
        %v684 = vpop.f32.mrb[0].mxu0
        %685 = vmatprep.mubr.f32.mxu0 0.0
        %686 = vmatmul.mubr.f32.gmra.mrb[0].mxu0 %v542
        %v687 = vpop.f32.mrb[0].mxu0
        %v688 = vadd.f32 %v569, %v687
        %v689 = vpop.f32.mrb[0].mxu0
        %690 = vmatprep.mubr.f32.mxu0 0.0
        %691 = vmatmul.mubr.f32.gmra.mrb[0].mxu0 %v543
        %v692 = vpop.f32.mrb[0].mxu0
        %v693 = vadd.f32 %v569, %v692
        %v694 = vpop.f32.mrb[0].mxu0
        %695 = vmatprep.mubr.f32.mxu0 0.0
        %696 = vmatmul.mubr.f32.gmra.mrb[0].mxu0 %v544
        %v697 = vpop.f32.mrb[0].mxu0
        %v698 = vadd.f32 %v569, %v697
        %v699 = vpop.f32.mrb[0].mxu0
        %700 = vmatprep.mubr.f32.mxu0 0.0
        %701 = vmatmul.mubr.f32.gmra.mrb[0].mxu0 %v545
        %v702 = vpop.f32.mrb[0].mxu0
        %v703 = vadd.f32 %v569, %v702
        %v704 = vpop.f32.mrb[0].mxu0
        %705 = vmatprep.mubr.f32.mxu0 0.0
        %706 = vmatmul.mubr.f32.gmra.mrb[0].mxu0 %v546
        %v707 = vpop.f32.mrb[0].mxu0
        %v708 = vadd.f32 %v569, %v707
        %v709 = vpop.f32.mrb[0].mxu0
        %710 = vmatprep.mubr.f32.mxu0 0.0
        %711 = vmatmul.mubr.f32.gmra.mrb[0].mxu0 %v547
        %v712 = vpop.f32.mrb[0].mxu0
        %v713 = vadd.f32 %v569, %v712
        %v714 = vpop.f32.mrb[0].mxu0
        %715 = vdwg.mxu0
        %v716 = vadd.f32 %v638, %v532
        %v717 = vadd.f32 %v643, %v533
        %v718 = vadd.f32 %v648, %v534
        %v719 = vadd.f32 %v653, %v535
        %v720 = vadd.f32 %v658, %v536
        %v721 = vadd.f32 %v663, %v537
        %v722 = vadd.f32 %v668, %v538
        %v723 = vadd.f32 %v673, %v539
        %v724 = vadd.f32 %v678, %v540
        %v725 = vadd.f32 %v683, %v541
        %v726 = vadd.f32 %v688, %v542
        %v727 = vadd.f32 %v693, %v543
        %v728 = vadd.f32 %v698, %v544
        %v729 = vadd.f32 %v703, %v545
        %v730 = vadd.f32 %v708, %v546
        %v731 = vadd.f32 %v713, %v547
        %vm732 = vcmp.ge.f32.partialorder %v716, 0.0
        %vm733 = vcmp.ge.f32.partialorder %v717, 0.0
        %vm734 = vcmp.ge.f32.partialorder %v718, 0.0
        %vm735 = vcmp.ge.f32.partialorder %v719, 0.0
        %vm736 = vcmp.ge.f32.partialorder %v720, 0.0
        %vm737 = vcmp.ge.f32.partialorder %v721, 0.0
        %vm738 = vcmp.ge.f32.partialorder %v722, 0.0
        %vm739 = vcmp.ge.f32.partialorder %v723, 0.0
        %vm740 = vcmp.ge.f32.partialorder %v724, 0.0
        %vm741 = vcmp.ge.f32.partialorder %v725, 0.0
        %vm742 = vcmp.ge.f32.partialorder %v726, 0.0
        %vm743 = vcmp.ge.f32.partialorder %v727, 0.0
        %vm744 = vcmp.ge.f32.partialorder %v728, 0.0
        %vm745 = vcmp.ge.f32.partialorder %v729, 0.0
        %vm746 = vcmp.ge.f32.partialorder %v730, 0.0
        %vm747 = vcmp.ge.f32.partialorder %v731, 0.0
        %v748 = vmul.f32 %v716, 0.1
        %v749 = vmul.f32 %v717, 0.1
        %v750 = vmul.f32 %v718, 0.1
        %v751 = vmul.f32 %v719, 0.1
        %v752 = vmul.f32 %v720, 0.1
        %v753 = vmul.f32 %v721, 0.1
        %v754 = vmul.f32 %v722, 0.1
        %v755 = vmul.f32 %v723, 0.1
        %v756 = vmul.f32 %v724, 0.1
        %v757 = vmul.f32 %v725, 0.1
        %v758 = vmul.f32 %v726, 0.1
        %v759 = vmul.f32 %v727, 0.1
        %v760 = vmul.f32 %v728, 0.1
        %v761 = vmul.f32 %v729, 0.1
        %v762 = vmul.f32 %v730, 0.1
        %v763 = vmul.f32 %v731, 0.1
        %v764 = vsel %vm732, %v716, %v748
        %v765 = vsel %vm733, %v717, %v749
        %v766 = vsel %vm734, %v718, %v750
        %v767 = vsel %vm735, %v719, %v751
        %v768 = vsel %vm736, %v720, %v752
        %v769 = vsel %vm737, %v721, %v753
        %v770 = vsel %vm738, %v722, %v754
        %v771 = vsel %vm739, %v723, %v755
        %v772 = vsel %vm740, %v724, %v756
        %v773 = vsel %vm741, %v725, %v757
        %v774 = vsel %vm742, %v726, %v758
        %v775 = vsel %vm743, %v727, %v759
        %v776 = vsel %vm744, %v728, %v760
        %v777 = vsel %vm745, %v729, %v761
        %v778 = vsel %vm746, %v730, %v762
        %v779 = vsel %vm747, %v731, %v763
        %s780 = scalar_lea.vmem [#allocation4], 128
        %v781 = vld [vmem:[%s780] sm:$0xff]
        %v782 = vld [vmem:[%s780 + $0x8] sm:$0xff]
        %v783 = vld [vmem:[%s780 + $0x10] sm:$0xff]
        %v784 = vld [vmem:[%s780 + $0x18] sm:$0xff]
        %v785 = vld [vmem:[%s780 + $0x20] sm:$0xff]
        %v786 = vld [vmem:[%s780 + $0x28] sm:$0xff]
        %v787 = vld [vmem:[%s780 + $0x30] sm:$0xff]
        %v788 = vld [vmem:[%s780 + $0x38] sm:$0xff]
        %v789 = vld [vmem:[%s780 + $0x40] sm:$0xff]
        %v790 = vld [vmem:[%s780 + $0x48] sm:$0xff]
        %v791 = vld [vmem:[%s780 + $0x50] sm:$0xff]
        %v792 = vld [vmem:[%s780 + $0x58] sm:$0xff]
        %v793 = vld [vmem:[%s780 + $0x60] sm:$0xff]
        %v794 = vld [vmem:[%s780 + $0x68] sm:$0xff]
        %v795 = vld [vmem:[%s780 + $0x70] sm:$0xff]
        %v796 = vld [vmem:[%s780 + $0x78] sm:$0xff]
        %s797 = scalar_lea.vmem %s4, 1
        %v798 = vld [vmem:[%s797] sm:$0x1]
        %v800 = vlaneseq
        %v801 = vshrl.u32 %v800, 7
        %v802 = vsub.s32 0, %v801
        %v803 = vrot.slane %v798, %v802
        %805 = vmatprep.subr.mxu0 0.0
        %806 = vmatpush1.msra.mxu0 %v781
        %807 = vmatprep.subr.mxu0 0.0
        %808 = vmatpush1.msra.mxu0 %v782
        %809 = vmatprep.subr.mxu0 0.0
        %810 = vmatpush1.msra.mxu0 %v783
        %811 = vmatprep.subr.mxu0 0.0
        %812 = vmatpush1.msra.mxu0 %v784
        %813 = vmatprep.subr.mxu0 0.0
        %814 = vmatpush1.msra.mxu0 %v785
        %815 = vmatprep.subr.mxu0 0.0
        %816 = vmatpush1.msra.mxu0 %v786
        %817 = vmatprep.subr.mxu0 0.0
        %818 = vmatpush1.msra.mxu0 %v787
        %819 = vmatprep.subr.mxu0 0.0
        %820 = vmatpush1.msra.mxu0 %v788
        %821 = vmatprep.subr.mxu0 0.0
        %822 = vmatpush1.msra.mxu0 %v789
        %823 = vmatprep.subr.mxu0 0.0
        %824 = vmatpush1.msra.mxu0 %v790
        %825 = vmatprep.subr.mxu0 0.0
        %826 = vmatpush1.msra.mxu0 %v791
        %827 = vmatprep.subr.mxu0 0.0
        %828 = vmatpush1.msra.mxu0 %v792
        %829 = vmatprep.subr.mxu0 0.0
        %830 = vmatpush1.msra.mxu0 %v793
        %831 = vmatprep.subr.mxu0 0.0
        %832 = vmatpush1.msra.mxu0 %v794
        %833 = vmatprep.subr.mxu0 0.0
        %834 = vmatpush1.msra.mxu0 %v795
        %835 = vmatprep.subr.mxu0 0.0
        %836 = vmatpush1.msra.mxu0 %v796
        %837 = vmatprep.subr.mxu0 0.0
        %838 = vmatpush1.msra.mxu0 0.0
        %839 = vmatprep.subr.mxu0 0.0
        %840 = vmatpush1.msra.mxu0 0.0
        %841 = vmatprep.subr.mxu0 0.0
        %842 = vmatpush1.msra.mxu0 0.0
        %843 = vmatprep.subr.mxu0 0.0
        %844 = vmatpush1.msra.mxu0 0.0
        %845 = vmatprep.subr.mxu0 0.0
        %846 = vmatpush1.msra.mxu0 0.0
        %847 = vmatprep.subr.mxu0 0.0
        %848 = vmatpush1.msra.mxu0 0.0
        %849 = vmatprep.subr.mxu0 0.0
        %850 = vmatpush1.msra.mxu0 0.0
        %851 = vmatprep.subr.mxu0 0.0
        %852 = vmatpush1.msra.mxu0 0.0
        %853 = vmatprep.subr.mxu0 0.0
        %854 = vmatpush1.msra.mxu0 0.0
        %855 = vmatprep.subr.mxu0 0.0
        %856 = vmatpush1.msra.mxu0 0.0
        %857 = vmatprep.subr.mxu0 0.0
        %858 = vmatpush1.msra.mxu0 0.0
        %859 = vmatprep.subr.mxu0 0.0
        %860 = vmatpush1.msra.mxu0 0.0
        %861 = vmatprep.subr.mxu0 0.0
        %862 = vmatpush1.msra.mxu0 0.0
        %863 = vmatprep.subr.mxu0 0.0
        %864 = vmatpush1.msra.mxu0 0.0
        %865 = vmatprep.subr.mxu0 0.0
        %866 = vmatpush1.msra.mxu0 0.0
        %867 = vmatprep.subr.mxu0 0.0
        %868 = vmatpush1.msra.mxu0 0.0
        %869 = vmatprep.mubr.f32.mxu0 0.0
        %870 = vmatmul.mubr.f32.gmra.mrb[0].mxu0 %v764
        %v871 = vpop.f32.mrb[0].mxu0
        %v872 = vadd.f32 %v803, %v871
        %v873 = vpop.f32.mrb[0].mxu0
        %874 = vmatprep.mubr.f32.mxu0 0.0
        %875 = vmatmul.mubr.f32.gmra.mrb[0].mxu0 %v765
        %v876 = vpop.f32.mrb[0].mxu0
        %v877 = vadd.f32 %v803, %v876
        %v878 = vpop.f32.mrb[0].mxu0
        %879 = vmatprep.mubr.f32.mxu0 0.0
        %880 = vmatmul.mubr.f32.gmra.mrb[0].mxu0 %v766
        %v881 = vpop.f32.mrb[0].mxu0
        %v882 = vadd.f32 %v803, %v881
        %v883 = vpop.f32.mrb[0].mxu0
        %884 = vmatprep.mubr.f32.mxu0 0.0
        %885 = vmatmul.mubr.f32.gmra.mrb[0].mxu0 %v767
        %v886 = vpop.f32.mrb[0].mxu0
        %v887 = vadd.f32 %v803, %v886
        %v888 = vpop.f32.mrb[0].mxu0
        %889 = vmatprep.mubr.f32.mxu0 0.0
        %890 = vmatmul.mubr.f32.gmra.mrb[0].mxu0 %v768
        %v891 = vpop.f32.mrb[0].mxu0
        %v892 = vadd.f32 %v803, %v891
        %v893 = vpop.f32.mrb[0].mxu0
        %894 = vmatprep.mubr.f32.mxu0 0.0
        %895 = vmatmul.mubr.f32.gmra.mrb[0].mxu0 %v769
        %v896 = vpop.f32.mrb[0].mxu0
        %v897 = vadd.f32 %v803, %v896
        %v898 = vpop.f32.mrb[0].mxu0
        %899 = vmatprep.mubr.f32.mxu0 0.0
        %900 = vmatmul.mubr.f32.gmra.mrb[0].mxu0 %v770
        %v901 = vpop.f32.mrb[0].mxu0
        %v902 = vadd.f32 %v803, %v901
        %v903 = vpop.f32.mrb[0].mxu0
        %904 = vmatprep.mubr.f32.mxu0 0.0
        %905 = vmatmul.mubr.f32.gmra.mrb[0].mxu0 %v771
        %v906 = vpop.f32.mrb[0].mxu0
        %v907 = vadd.f32 %v803, %v906
        %v908 = vpop.f32.mrb[0].mxu0
        %909 = vmatprep.mubr.f32.mxu0 0.0
        %910 = vmatmul.mubr.f32.gmra.mrb[0].mxu0 %v772
        %v911 = vpop.f32.mrb[0].mxu0
        %v912 = vadd.f32 %v803, %v911
        %v913 = vpop.f32.mrb[0].mxu0
        %914 = vmatprep.mubr.f32.mxu0 0.0
        %915 = vmatmul.mubr.f32.gmra.mrb[0].mxu0 %v773
        %v916 = vpop.f32.mrb[0].mxu0
        %v917 = vadd.f32 %v803, %v916
        %v918 = vpop.f32.mrb[0].mxu0
        %919 = vmatprep.mubr.f32.mxu0 0.0
        %920 = vmatmul.mubr.f32.gmra.mrb[0].mxu0 %v774
        %v921 = vpop.f32.mrb[0].mxu0
        %v922 = vadd.f32 %v803, %v921
        %v923 = vpop.f32.mrb[0].mxu0
        %924 = vmatprep.mubr.f32.mxu0 0.0
        %925 = vmatmul.mubr.f32.gmra.mrb[0].mxu0 %v775
        %v926 = vpop.f32.mrb[0].mxu0
        %v927 = vadd.f32 %v803, %v926
        %v928 = vpop.f32.mrb[0].mxu0
        %929 = vmatprep.mubr.f32.mxu0 0.0
        %930 = vmatmul.mubr.f32.gmra.mrb[0].mxu0 %v776
        %v931 = vpop.f32.mrb[0].mxu0
        %v932 = vadd.f32 %v803, %v931
        %v933 = vpop.f32.mrb[0].mxu0
        %934 = vmatprep.mubr.f32.mxu0 0.0
        %935 = vmatmul.mubr.f32.gmra.mrb[0].mxu0 %v777
        %v936 = vpop.f32.mrb[0].mxu0
        %v937 = vadd.f32 %v803, %v936
        %v938 = vpop.f32.mrb[0].mxu0
        %939 = vmatprep.mubr.f32.mxu0 0.0
        %940 = vmatmul.mubr.f32.gmra.mrb[0].mxu0 %v778
        %v941 = vpop.f32.mrb[0].mxu0
        %v942 = vadd.f32 %v803, %v941
        %v943 = vpop.f32.mrb[0].mxu0
        %944 = vmatprep.mubr.f32.mxu0 0.0
        %945 = vmatmul.mubr.f32.gmra.mrb[0].mxu0 %v779
        %v946 = vpop.f32.mrb[0].mxu0
        %v947 = vadd.f32 %v803, %v946
        %v948 = vpop.f32.mrb[0].mxu0
        %949 = vdwg.mxu0
        %v950 = vadd.f32 %v872, %v764
        %v951 = vadd.f32 %v877, %v765
        %v952 = vadd.f32 %v882, %v766
        %v953 = vadd.f32 %v887, %v767
        %v954 = vadd.f32 %v892, %v768
        %v955 = vadd.f32 %v897, %v769
        %v956 = vadd.f32 %v902, %v770
        %v957 = vadd.f32 %v907, %v771
        %v958 = vadd.f32 %v912, %v772
        %v959 = vadd.f32 %v917, %v773
        %v960 = vadd.f32 %v922, %v774
        %v961 = vadd.f32 %v927, %v775
        %v962 = vadd.f32 %v932, %v776
        %v963 = vadd.f32 %v937, %v777
        %v964 = vadd.f32 %v942, %v778
        %v965 = vadd.f32 %v947, %v779
        %vm966 = vcmp.ge.f32.partialorder %v950, 0.0
        %vm967 = vcmp.ge.f32.partialorder %v951, 0.0
        %vm968 = vcmp.ge.f32.partialorder %v952, 0.0
        %vm969 = vcmp.ge.f32.partialorder %v953, 0.0
        %vm970 = vcmp.ge.f32.partialorder %v954, 0.0
        %vm971 = vcmp.ge.f32.partialorder %v955, 0.0
        %vm972 = vcmp.ge.f32.partialorder %v956, 0.0
        %vm973 = vcmp.ge.f32.partialorder %v957, 0.0
        %vm974 = vcmp.ge.f32.partialorder %v958, 0.0
        %vm975 = vcmp.ge.f32.partialorder %v959, 0.0
        %vm976 = vcmp.ge.f32.partialorder %v960, 0.0
        %vm977 = vcmp.ge.f32.partialorder %v961, 0.0
        %vm978 = vcmp.ge.f32.partialorder %v962, 0.0
        %vm979 = vcmp.ge.f32.partialorder %v963, 0.0
        %vm980 = vcmp.ge.f32.partialorder %v964, 0.0
        %vm981 = vcmp.ge.f32.partialorder %v965, 0.0
        %v982 = vmul.f32 %v950, 0.1
        %v983 = vmul.f32 %v951, 0.1
        %v984 = vmul.f32 %v952, 0.1
        %v985 = vmul.f32 %v953, 0.1
        %v986 = vmul.f32 %v954, 0.1
        %v987 = vmul.f32 %v955, 0.1
        %v988 = vmul.f32 %v956, 0.1
        %v989 = vmul.f32 %v957, 0.1
        %v990 = vmul.f32 %v958, 0.1
        %v991 = vmul.f32 %v959, 0.1
        %v992 = vmul.f32 %v960, 0.1
        %v993 = vmul.f32 %v961, 0.1
        %v994 = vmul.f32 %v962, 0.1
        %v995 = vmul.f32 %v963, 0.1
        %v996 = vmul.f32 %v964, 0.1
        %v997 = vmul.f32 %v965, 0.1
        %v998 = vsel %vm966, %v950, %v982
        %v999 = vsel %vm967, %v951, %v983
        %v1000 = vsel %vm968, %v952, %v984
        %v1001 = vsel %vm969, %v953, %v985
        %v1002 = vsel %vm970, %v954, %v986
        %v1003 = vsel %vm971, %v955, %v987
        %v1004 = vsel %vm972, %v956, %v988
        %v1005 = vsel %vm973, %v957, %v989
        %v1006 = vsel %vm974, %v958, %v990
        %v1007 = vsel %vm975, %v959, %v991
        %v1008 = vsel %vm976, %v960, %v992
        %v1009 = vsel %vm977, %v961, %v993
        %v1010 = vsel %vm978, %v962, %v994
        %v1011 = vsel %vm979, %v963, %v995
        %v1012 = vsel %vm980, %v964, %v996
        %v1013 = vsel %vm981, %v965, %v997
        %v1014 = vld [vmem:[%s5] sm:$0xff]
        %v1015 = vld [vmem:[%s5 + $0x8] sm:$0xff]
        %v1016 = vld [vmem:[%s5 + $0x10] sm:$0xff]
        %v1017 = vld [vmem:[%s5 + $0x18] sm:$0xff]
        %v1018 = vld [vmem:[%s5 + $0x20] sm:$0xff]
        %v1019 = vld [vmem:[%s5 + $0x28] sm:$0xff]
        %v1020 = vld [vmem:[%s5 + $0x30] sm:$0xff]
        %v1021 = vld [vmem:[%s5 + $0x38] sm:$0xff]
        %v1022 = vld [vmem:[%s5 + $0x40] sm:$0xff]
        %v1023 = vld [vmem:[%s5 + $0x48] sm:$0xff]
        %v1024 = vld [vmem:[%s5 + $0x50] sm:$0xff]
        %v1025 = vld [vmem:[%s5 + $0x58] sm:$0xff]
        %v1026 = vld [vmem:[%s5 + $0x60] sm:$0xff]
        %v1027 = vld [vmem:[%s5 + $0x68] sm:$0xff]
        %v1028 = vld [vmem:[%s5 + $0x70] sm:$0xff]
        %v1029 = vld [vmem:[%s5 + $0x78] sm:$0xff]
        %v1030 = vld [vmem:[%s6] sm:$0x1]
        %v1032 = vlaneseq
        %v1033 = vshrl.u32 %v1032, 7
        %v1034 = vsub.s32 0, %v1033
        %v1035 = vrot.slane %v1030, %v1034
        %1037 = vmatprep.subr.mxu0 0.0
        %1038 = vmatpush1.msra.mxu0 %v1014
        %1039 = vmatprep.subr.mxu0 0.0
        %1040 = vmatpush1.msra.mxu0 %v1015
        %1041 = vmatprep.subr.mxu0 0.0
        %1042 = vmatpush1.msra.mxu0 %v1016
        %1043 = vmatprep.subr.mxu0 0.0
        %1044 = vmatpush1.msra.mxu0 %v1017
        %1045 = vmatprep.subr.mxu0 0.0
        %1046 = vmatpush1.msra.mxu0 %v1018
        %1047 = vmatprep.subr.mxu0 0.0
        %1048 = vmatpush1.msra.mxu0 %v1019
        %1049 = vmatprep.subr.mxu0 0.0
        %1050 = vmatpush1.msra.mxu0 %v1020
        %1051 = vmatprep.subr.mxu0 0.0
        %1052 = vmatpush1.msra.mxu0 %v1021
        %1053 = vmatprep.subr.mxu0 0.0
        %1054 = vmatpush1.msra.mxu0 %v1022
        %1055 = vmatprep.subr.mxu0 0.0
        %1056 = vmatpush1.msra.mxu0 %v1023
        %1057 = vmatprep.subr.mxu0 0.0
        %1058 = vmatpush1.msra.mxu0 %v1024
        %1059 = vmatprep.subr.mxu0 0.0
        %1060 = vmatpush1.msra.mxu0 %v1025
        %1061 = vmatprep.subr.mxu0 0.0
        %1062 = vmatpush1.msra.mxu0 %v1026
        %1063 = vmatprep.subr.mxu0 0.0
        %1064 = vmatpush1.msra.mxu0 %v1027
        %1065 = vmatprep.subr.mxu0 0.0
        %1066 = vmatpush1.msra.mxu0 %v1028
        %1067 = vmatprep.subr.mxu0 0.0
        %1068 = vmatpush1.msra.mxu0 %v1029
        %1069 = vmatprep.subr.mxu0 0.0
        %1070 = vmatpush1.msra.mxu0 0.0
        %1071 = vmatprep.subr.mxu0 0.0
        %1072 = vmatpush1.msra.mxu0 0.0
        %1073 = vmatprep.subr.mxu0 0.0
        %1074 = vmatpush1.msra.mxu0 0.0
        %1075 = vmatprep.subr.mxu0 0.0
        %1076 = vmatpush1.msra.mxu0 0.0
        %1077 = vmatprep.subr.mxu0 0.0
        %1078 = vmatpush1.msra.mxu0 0.0
        %1079 = vmatprep.subr.mxu0 0.0
        %1080 = vmatpush1.msra.mxu0 0.0
        %1081 = vmatprep.subr.mxu0 0.0
        %1082 = vmatpush1.msra.mxu0 0.0
        %1083 = vmatprep.subr.mxu0 0.0
        %1084 = vmatpush1.msra.mxu0 0.0
        %1085 = vmatprep.subr.mxu0 0.0
        %1086 = vmatpush1.msra.mxu0 0.0
        %1087 = vmatprep.subr.mxu0 0.0
        %1088 = vmatpush1.msra.mxu0 0.0
        %1089 = vmatprep.subr.mxu0 0.0
        %1090 = vmatpush1.msra.mxu0 0.0
        %1091 = vmatprep.subr.mxu0 0.0
        %1092 = vmatpush1.msra.mxu0 0.0
        %1093 = vmatprep.subr.mxu0 0.0
        %1094 = vmatpush1.msra.mxu0 0.0
        %1095 = vmatprep.subr.mxu0 0.0
        %1096 = vmatpush1.msra.mxu0 0.0
        %1097 = vmatprep.subr.mxu0 0.0
        %1098 = vmatpush1.msra.mxu0 0.0
        %1099 = vmatprep.subr.mxu0 0.0
        %1100 = vmatpush1.msra.mxu0 0.0
        %1101 = vmatprep.mubr.f32.mxu0 0.0
        %1102 = vmatmul.mubr.f32.gmra.mrb[0].mxu0 %v998
        %v1103 = vpop.f32.mrb[0].mxu0
        %v1104 = vadd.f32 %v1035, %v1103
        %v1105 = vpop.f32.mrb[0].mxu0
        %1106 = vmatprep.mubr.f32.mxu0 0.0
        %1107 = vmatmul.mubr.f32.gmra.mrb[0].mxu0 %v999
        %v1108 = vpop.f32.mrb[0].mxu0
        %v1109 = vadd.f32 %v1035, %v1108
        %v1110 = vpop.f32.mrb[0].mxu0
        %1111 = vmatprep.mubr.f32.mxu0 0.0
        %1112 = vmatmul.mubr.f32.gmra.mrb[0].mxu0 %v1000
        %v1113 = vpop.f32.mrb[0].mxu0
        %v1114 = vadd.f32 %v1035, %v1113
        %v1115 = vpop.f32.mrb[0].mxu0
        %1116 = vmatprep.mubr.f32.mxu0 0.0
        %1117 = vmatmul.mubr.f32.gmra.mrb[0].mxu0 %v1001
        %v1118 = vpop.f32.mrb[0].mxu0
        %v1119 = vadd.f32 %v1035, %v1118
        %v1120 = vpop.f32.mrb[0].mxu0
        %1121 = vmatprep.mubr.f32.mxu0 0.0
        %1122 = vmatmul.mubr.f32.gmra.mrb[0].mxu0 %v1002
        %v1123 = vpop.f32.mrb[0].mxu0
        %v1124 = vadd.f32 %v1035, %v1123
        %v1125 = vpop.f32.mrb[0].mxu0
        %1126 = vmatprep.mubr.f32.mxu0 0.0
        %1127 = vmatmul.mubr.f32.gmra.mrb[0].mxu0 %v1003
        %v1128 = vpop.f32.mrb[0].mxu0
        %v1129 = vadd.f32 %v1035, %v1128
        %v1130 = vpop.f32.mrb[0].mxu0
        %1131 = vmatprep.mubr.f32.mxu0 0.0
        %1132 = vmatmul.mubr.f32.gmra.mrb[0].mxu0 %v1004
        %v1133 = vpop.f32.mrb[0].mxu0
        %v1134 = vadd.f32 %v1035, %v1133
        %v1135 = vpop.f32.mrb[0].mxu0
        %1136 = vmatprep.mubr.f32.mxu0 0.0
        %1137 = vmatmul.mubr.f32.gmra.mrb[0].mxu0 %v1005
        %v1138 = vpop.f32.mrb[0].mxu0
        %v1139 = vadd.f32 %v1035, %v1138
        %v1140 = vpop.f32.mrb[0].mxu0
        %1141 = vmatprep.mubr.f32.mxu0 0.0
        %1142 = vmatmul.mubr.f32.gmra.mrb[0].mxu0 %v1006
        %v1143 = vpop.f32.mrb[0].mxu0
        %v1144 = vadd.f32 %v1035, %v1143
        %v1145 = vpop.f32.mrb[0].mxu0
        %1146 = vmatprep.mubr.f32.mxu0 0.0
        %1147 = vmatmul.mubr.f32.gmra.mrb[0].mxu0 %v1007
        %v1148 = vpop.f32.mrb[0].mxu0
        %v1149 = vadd.f32 %v1035, %v1148
        %v1150 = vpop.f32.mrb[0].mxu0
        %1151 = vmatprep.mubr.f32.mxu0 0.0
        %1152 = vmatmul.mubr.f32.gmra.mrb[0].mxu0 %v1008
        %v1153 = vpop.f32.mrb[0].mxu0
        %v1154 = vadd.f32 %v1035, %v1153
        %v1155 = vpop.f32.mrb[0].mxu0
        %1156 = vmatprep.mubr.f32.mxu0 0.0
        %1157 = vmatmul.mubr.f32.gmra.mrb[0].mxu0 %v1009
        %v1158 = vpop.f32.mrb[0].mxu0
        %v1159 = vadd.f32 %v1035, %v1158
        %v1160 = vpop.f32.mrb[0].mxu0
        %1161 = vmatprep.mubr.f32.mxu0 0.0
        %1162 = vmatmul.mubr.f32.gmra.mrb[0].mxu0 %v1010
        %v1163 = vpop.f32.mrb[0].mxu0
        %v1164 = vadd.f32 %v1035, %v1163
        %v1165 = vpop.f32.mrb[0].mxu0
        %1166 = vmatprep.mubr.f32.mxu0 0.0
        %1167 = vmatmul.mubr.f32.gmra.mrb[0].mxu0 %v1011
        %v1168 = vpop.f32.mrb[0].mxu0
        %v1169 = vadd.f32 %v1035, %v1168
        %v1170 = vpop.f32.mrb[0].mxu0
        %1171 = vmatprep.mubr.f32.mxu0 0.0
        %1172 = vmatmul.mubr.f32.gmra.mrb[0].mxu0 %v1012
        %v1173 = vpop.f32.mrb[0].mxu0
        %v1174 = vadd.f32 %v1035, %v1173
        %v1175 = vpop.f32.mrb[0].mxu0
        %1176 = vmatprep.mubr.f32.mxu0 0.0
        %1177 = vmatmul.mubr.f32.gmra.mrb[0].mxu0 %v1013
        %v1178 = vpop.f32.mrb[0].mxu0
        %v1179 = vadd.f32 %v1035, %v1178
        %v1180 = vpop.f32.mrb[0].mxu0
        %1181 = vdwg.mxu0
        %vm1182 = vcmask 195584
        %v1183 = vsel %vm1182, %v1104, -inf
        %1184 = vmax.xlane.f32.xlu0 %v1183
        %v1185 = vpop.xlane.xlu0 %1184
        %v1186 = vsel %vm1182, %v1109, -inf
        %1187 = vmax.xlane.f32.xlu0 %v1186
        %v1188 = vpop.xlane.xlu0 %1187
        %v1189 = vsel %vm1182, %v1114, -inf
        %1190 = vmax.xlane.f32.xlu0 %v1189
        %v1191 = vpop.xlane.xlu0 %1190
        %v1192 = vsel %vm1182, %v1119, -inf
        %1193 = vmax.xlane.f32.xlu0 %v1192
        %v1194 = vpop.xlane.xlu0 %1193
        %v1195 = vsel %vm1182, %v1124, -inf
        %1196 = vmax.xlane.f32.xlu0 %v1195
        %v1197 = vpop.xlane.xlu0 %1196
        %v1198 = vsel %vm1182, %v1129, -inf
        %1199 = vmax.xlane.f32.xlu0 %v1198
        %v1200 = vpop.xlane.xlu0 %1199
        %v1201 = vsel %vm1182, %v1134, -inf
        %1202 = vmax.xlane.f32.xlu0 %v1201
        %v1203 = vpop.xlane.xlu0 %1202
        %v1204 = vsel %vm1182, %v1139, -inf
        %1205 = vmax.xlane.f32.xlu0 %v1204
        %v1206 = vpop.xlane.xlu0 %1205
        %v1207 = vsel %vm1182, %v1144, -inf
        %1208 = vmax.xlane.f32.xlu0 %v1207
        %v1209 = vpop.xlane.xlu0 %1208
        %v1210 = vsel %vm1182, %v1149, -inf
        %1211 = vmax.xlane.f32.xlu0 %v1210
        %v1212 = vpop.xlane.xlu0 %1211
        %v1213 = vsel %vm1182, %v1154, -inf
        %1214 = vmax.xlane.f32.xlu0 %v1213
        %v1215 = vpop.xlane.xlu0 %1214
        %v1216 = vsel %vm1182, %v1159, -inf
        %1217 = vmax.xlane.f32.xlu0 %v1216
        %v1218 = vpop.xlane.xlu0 %1217
        %v1219 = vsel %vm1182, %v1164, -inf
        %1220 = vmax.xlane.f32.xlu0 %v1219
        %v1221 = vpop.xlane.xlu0 %1220
        %v1222 = vsel %vm1182, %v1169, -inf
        %1223 = vmax.xlane.f32.xlu0 %v1222
        %v1224 = vpop.xlane.xlu0 %1223
        %v1225 = vsel %vm1182, %v1174, -inf
        %1226 = vmax.xlane.f32.xlu0 %v1225
        %v1227 = vpop.xlane.xlu0 %1226
        %v1228 = vsel %vm1182, %v1179, -inf
        %1229 = vmax.xlane.f32.xlu0 %v1228
        %v1230 = vpop.xlane.xlu0 %1229
        %v1231 = vsub.f32 %v1104, %v1185
        %v1232 = vsub.f32 %v1109, %v1188
        %v1233 = vsub.f32 %v1114, %v1191
        %v1234 = vsub.f32 %v1119, %v1194
        %v1235 = vsub.f32 %v1124, %v1197
        %v1236 = vsub.f32 %v1129, %v1200
        %v1237 = vsub.f32 %v1134, %v1203
        %v1238 = vsub.f32 %v1139, %v1206
        %v1239 = vsub.f32 %v1144, %v1209
        %v1240 = vsub.f32 %v1149, %v1212
        %v1241 = vsub.f32 %v1154, %v1215
        %v1242 = vsub.f32 %v1159, %v1218
        %v1243 = vsub.f32 %v1164, %v1221
        %v1244 = vsub.f32 %v1169, %v1224
        %v1245 = vsub.f32 %v1174, %v1227
        %v1246 = vsub.f32 %v1179, %v1230
        %v1247 = vmul.f32 %v1231, 1.442695
        %v1248 = vpow.pop %v1247
        %v1249 = vmul.f32 %v1232, 1.442695
        %v1250 = vpow.pop %v1249
        %v1251 = vmul.f32 %v1233, 1.442695
        %v1252 = vpow.pop %v1251
        %v1253 = vmul.f32 %v1234, 1.442695
        %v1254 = vpow.pop %v1253
        %v1255 = vmul.f32 %v1235, 1.442695
        %v1256 = vpow.pop %v1255
        %v1257 = vmul.f32 %v1236, 1.442695
        %v1258 = vpow.pop %v1257
        %v1259 = vmul.f32 %v1237, 1.442695
        %v1260 = vpow.pop %v1259
        %v1261 = vmul.f32 %v1238, 1.442695
        %v1262 = vpow.pop %v1261
        %v1263 = vmul.f32 %v1239, 1.442695
        %v1264 = vpow.pop %v1263
        %v1265 = vmul.f32 %v1240, 1.442695
        %v1266 = vpow.pop %v1265
        %v1267 = vmul.f32 %v1241, 1.442695
        %v1268 = vpow.pop %v1267
        %v1269 = vmul.f32 %v1242, 1.442695
        %v1270 = vpow.pop %v1269
        %v1271 = vmul.f32 %v1243, 1.442695
        %v1272 = vpow.pop %v1271
        %v1273 = vmul.f32 %v1244, 1.442695
        %v1274 = vpow.pop %v1273
        %v1275 = vmul.f32 %v1245, 1.442695
        %v1276 = vpow.pop %v1275
        %v1277 = vmul.f32 %v1246, 1.442695
        %v1278 = vpow.pop %v1277
        %v1279 = vsel %vm1182, %v1248, 0.0
        %1280 = vadd.xlane.f32.xlu0 %v1279
        %v1281 = vpop.xlane.xlu0 %1280
        %v1282 = vsel %vm1182, %v1250, 0.0
        %1283 = vadd.xlane.f32.xlu0 %v1282
        %v1284 = vpop.xlane.xlu0 %1283
        %v1285 = vsel %vm1182, %v1252, 0.0
        %1286 = vadd.xlane.f32.xlu0 %v1285
        %v1287 = vpop.xlane.xlu0 %1286
        %v1288 = vsel %vm1182, %v1254, 0.0
        %1289 = vadd.xlane.f32.xlu0 %v1288
        %v1290 = vpop.xlane.xlu0 %1289
        %v1291 = vsel %vm1182, %v1256, 0.0
        %1292 = vadd.xlane.f32.xlu0 %v1291
        %v1293 = vpop.xlane.xlu0 %1292
        %v1294 = vsel %vm1182, %v1258, 0.0
        %1295 = vadd.xlane.f32.xlu0 %v1294
        %v1296 = vpop.xlane.xlu0 %1295
        %v1297 = vsel %vm1182, %v1260, 0.0
        %1298 = vadd.xlane.f32.xlu0 %v1297
        %v1299 = vpop.xlane.xlu0 %1298
        %v1300 = vsel %vm1182, %v1262, 0.0
        %1301 = vadd.xlane.f32.xlu0 %v1300
        %v1302 = vpop.xlane.xlu0 %1301
        %v1303 = vsel %vm1182, %v1264, 0.0
        %1304 = vadd.xlane.f32.xlu0 %v1303
        %v1305 = vpop.xlane.xlu0 %1304
        %v1306 = vsel %vm1182, %v1266, 0.0
        %1307 = vadd.xlane.f32.xlu0 %v1306
        %v1308 = vpop.xlane.xlu0 %1307
        %v1309 = vsel %vm1182, %v1268, 0.0
        %1310 = vadd.xlane.f32.xlu0 %v1309
        %v1311 = vpop.xlane.xlu0 %1310
        %v1312 = vsel %vm1182, %v1270, 0.0
        %1313 = vadd.xlane.f32.xlu0 %v1312
        %v1314 = vpop.xlane.xlu0 %1313
        %v1315 = vsel %vm1182, %v1272, 0.0
        %1316 = vadd.xlane.f32.xlu0 %v1315
        %v1317 = vpop.xlane.xlu0 %1316
        %v1318 = vsel %vm1182, %v1274, 0.0
        %1319 = vadd.xlane.f32.xlu0 %v1318
        %v1320 = vpop.xlane.xlu0 %1319
        %v1321 = vsel %vm1182, %v1276, 0.0
        %1322 = vadd.xlane.f32.xlu0 %v1321
        %v1323 = vpop.xlane.xlu0 %1322
        %v1324 = vsel %vm1182, %v1278, 0.0
        %1325 = vadd.xlane.f32.xlu0 %v1324
        %v1326 = vpop.xlane.xlu0 %1325
        %v1327 = vrcp.pop %v1281
        %v1328 = vmul.f32 %v1248, %v1327
        %v1329 = vrcp.pop %v1284
        %v1330 = vmul.f32 %v1250, %v1329
        %v1331 = vrcp.pop %v1287
        %v1332 = vmul.f32 %v1252, %v1331
        %v1333 = vrcp.pop %v1290
        %v1334 = vmul.f32 %v1254, %v1333
        %v1335 = vrcp.pop %v1293
        %v1336 = vmul.f32 %v1256, %v1335
        %v1337 = vrcp.pop %v1296
        %v1338 = vmul.f32 %v1258, %v1337
        %v1339 = vrcp.pop %v1299
        %v1340 = vmul.f32 %v1260, %v1339
        %v1341 = vrcp.pop %v1302
        %v1342 = vmul.f32 %v1262, %v1341
        %v1343 = vrcp.pop %v1305
        %v1344 = vmul.f32 %v1264, %v1343
        %v1345 = vrcp.pop %v1308
        %v1346 = vmul.f32 %v1266, %v1345
        %v1347 = vrcp.pop %v1311
        %v1348 = vmul.f32 %v1268, %v1347
        %v1349 = vrcp.pop %v1314
        %v1350 = vmul.f32 %v1270, %v1349
        %v1351 = vrcp.pop %v1317
        %v1352 = vmul.f32 %v1272, %v1351
        %v1353 = vrcp.pop %v1320
        %v1354 = vmul.f32 %v1274, %v1353
        %v1355 = vrcp.pop %v1323
        %v1356 = vmul.f32 %v1276, %v1355
        %v1357 = vrcp.pop %v1326
        %v1358 = vmul.f32 %v1278, %v1357
        %1359 = vst.msk [vmem:[%s314] sm:$0xff] %vm1182, %v1328
        %1360 = vst.msk [vmem:[%s314 + $0x8] sm:$0xff] %vm1182, %v1330
        %1361 = vst.msk [vmem:[%s314 + $0x10] sm:$0xff] %vm1182, %v1332
        %1362 = vst.msk [vmem:[%s314 + $0x18] sm:$0xff] %vm1182, %v1334
        %1363 = vst.msk [vmem:[%s314 + $0x20] sm:$0xff] %vm1182, %v1336
        %1364 = vst.msk [vmem:[%s314 + $0x28] sm:$0xff] %vm1182, %v1338
        %1365 = vst.msk [vmem:[%s314 + $0x30] sm:$0xff] %vm1182, %v1340
        %1366 = vst.msk [vmem:[%s314 + $0x38] sm:$0xff] %vm1182, %v1342
        %1367 = vst.msk [vmem:[%s314 + $0x40] sm:$0xff] %vm1182, %v1344
        %1368 = vst.msk [vmem:[%s314 + $0x48] sm:$0xff] %vm1182, %v1346
        %1369 = vst.msk [vmem:[%s314 + $0x50] sm:$0xff] %vm1182, %v1348
        %1370 = vst.msk [vmem:[%s314 + $0x58] sm:$0xff] %vm1182, %v1350
        %1371 = vst.msk [vmem:[%s314 + $0x60] sm:$0xff] %vm1182, %v1352
        %1372 = vst.msk [vmem:[%s314 + $0x68] sm:$0xff] %vm1182, %v1354
        %1373 = vst.msk [vmem:[%s314 + $0x70] sm:$0xff] %vm1182, %v1356
        %1374 = vst.msk [vmem:[%s314 + $0x78] sm:$0xff] %vm1182, %v1358
        %s1375 = smul.u32 16, %s22
        %p1376 = scmp.lt.s32.totalorder %s1375, 63
        %s1377 = scalar_select %p1376, %s1375, 63
        %s1378 = smul.addr %s1377, 8
        %s1379 = scalar_lea.vmem %s7, %s1378
        // Predicated region
        $region57: #{tpu_custom_call.1} parent=47 // pred_check
          %p1380 = pneg %p192
        $region58: #{tpu_custom_call.1} parent=47 // pred_check_branch
          %1382 = sbr.rel (%p1380) target = $region60
        $region59: #{tpu_custom_call.1} parent=47 // pred_region
          %s1383 = smul.u32 16, %s22
        $region60: #{tpu_custom_call.1} parent=47 // pred_fallthru
          _
      $region48: #{tpu_custom_call.1} parent=5 // pred_fallthru
        _
      %p1384 = scmp.le.s32.totalorder 2, %s17
      // Predicated region
      $region61: #{tpu_custom_call.1} parent=5 // pred_check
        %p1385 = pneg %p1384
      $region62: #{tpu_custom_call.1} parent=5 // pred_check_branch
        %1387 = sbr.rel (%p1385) target = $region64
      $region63: #{tpu_custom_call.1} parent=5 // pred_region
        %s1388 = ssub.s32 %s17, 2
        // Predicated region
        $region65: #{tpu_custom_call.1} parent=63 // pred_check
          %p1389 = pneg %p198
        $region66: #{tpu_custom_call.1} parent=63 // pred_check_branch
          %1391 = sbr.rel (%p1389) target = $region68
        $region67: #{tpu_custom_call.1} parent=63 // pred_region
          %s1392 = smul.u32 16, %s23
          %p1393 = scmp.lt.s32.totalorder %s1392, 63
          %s1394 = scalar_select %p1393, %s1392, 63
          %s1395 = smul.addr %s1394, 8
          %s1396 = scalar_lea.vmem %s7, %s1395
        $region68: #{tpu_custom_call.1} parent=63 // pred_fallthru
          _
      $region64: #{tpu_custom_call.1} parent=5 // pred_fallthru
        _
    $region6: #{tpu_custom_call.1} parent=1 // loop_footer
      %s21 = sadd.s32 1, %s17
    $region7: #{tpu_custom_call.1} parent=1 // loop_footer_branch
      %16 = sbr.rel target = $region3
    $region8: #{tpu_custom_call.1} parent=1 // loop_exit
      _
    %1397 = vsyncpa [#allocation3], 1
    %s1398 = scalar_lea.sflag [#allocation3], 1
    %1399 = vsyncpa %s1398, 1
    %1400 = vsyncpa [#allocation5], 1

</llo_original>
